<compile_context>
chip_gen: v7x
topology: tpu7x:2x2x1
jax: 0.10.0
libtpu: 0.0.40
codegen_flags: <defaults>
</compile_context>

<pallas_src>
import numpy as np
import jax
import jax.numpy as jnp
from jax import lax
from jax.experimental import pallas as pl
from jax.experimental.pallas import tpu as pltpu

EPS = 1e-5
HSP = 4            # spatial height (fixed by the module: e.view(-1, C, 4, 4))
WSP = 4            # spatial width
PIX = HSP * WSP    # pixels per batch element
TB = 8             # batch elements (rows) per grid step


# --------------------------------------------------------------------------
# Pallas kernel: one (TB, C*PIX) batch tile per grid step; weights resident.
# One matmul per residual-block layer + one for the 1x1 head.
# --------------------------------------------------------------------------
def postpool_kernel(x_ref, wl_ref, a3_ref, wh_ref, ah_ref, o_ref):
    # x_ref : (TB, D)       f32   NCHW-flattened rows, D = C*PIX (512)
    # wl_ref: (NL, D, D)    bf16  lowered 3x3-conv matrices
    # a3_ref: (NL, 2, D)    f32   folded conv-bias + eval-BN (scale, shift)
    # wh_ref: (D, DO)       bf16  lowered 1x1 head matrix (DO = k*c_dim*PIX, padded to 128)
    # ah_ref: (2, DO)       f32   folded head affine
    # o_ref : (TB, DO)      f32   lane-dense output block
    NL = wl_ref.shape[0]

    x0 = x_ref[...]                       # residual input, kept in vregs
    act = x0

    # ----- ConvResBlock: NL x (conv3x3 -> folded BN), ReLU between layers -----
    for l in range(NL):                   # unrolled: NL is a trace-time constant
        y = jnp.dot(act.astype(jnp.bfloat16), wl_ref[l],
                    preferred_element_type=jnp.float32)
        y = y * a3_ref[l, 0:1, :] + a3_ref[l, 1:2, :]   # conv bias + eval BN
        if l < NL - 1:
            y = jnp.maximum(y, 0.0)                     # activation between layers
        act = y

    # residual add + activation
    e = jnp.maximum(act + x0, 0.0).astype(jnp.bfloat16)

    # ----- Conv2d1x1 (hid_dim -> k*c_dim) + folded BatchNorm -----
    z = jnp.dot(e, wh_ref[...], preferred_element_type=jnp.float32)
    o_ref[...] = z * ah_ref[0:1, :] + ah_ref[1:2, :]    # unmasked full-lane store


# --------------------------------------------------------------------------
# Wrapper
# --------------------------------------------------------------------------
def postpool(e_in, wl_all, a3_all, whp, ahp, c_dim, ladder=False):
    """e_in: (..., hid_dim, 4, 4) or (B, hid_dim*16) float32 (PyTorch NCHW)."""
    D = wl_all.shape[-1]                   # C * PIX
    NL = wl_all.shape[0]
    DO = whp.shape[1]

    x = e_in.reshape(-1, D)                # e.view(-1, hid_dim, 4, 4): free reshape
    B = x.shape[0]
    B_pad = ((B + TB - 1) // TB) * TB
    if B_pad != B:
        x = jnp.pad(x, ((0, B_pad - B), (0, 0)))

    out = pl.pallas_call(
        postpool_kernel,
        out_shape=jax.ShapeDtypeStruct((B_pad, DO), jnp.float32),
        grid=(B_pad // TB,),
        in_specs=[
            pl.BlockSpec((TB, D), lambda i: (i, 0)),           # activations
            pl.BlockSpec((NL, D, D), lambda i: (0, 0, 0)),     # lowered conv3x3
            pl.BlockSpec((NL, 2, D), lambda i: (0, 0, 0)),     # folded affines
            pl.BlockSpec((D, DO), lambda i: (0, 0)),           # lowered 1x1 head
            pl.BlockSpec((2, DO), lambda i: (0, 0)),           # head affine
        ],
        out_specs=pl.BlockSpec((TB, DO), lambda i: (i, 0)),
        compiler_params=pltpu.CompilerParams(dimension_semantics=("parallel",)),
    )(x, wl_all, a3_all, whp, ahp)

    k = 3 if ladder else 2
    KC = k * c_dim
    out = out[:B, :KC * PIX].reshape(B, KC, HSP, WSP)          # free when unpadded
    if ladder:
        return out[:, :c_dim], out[:, c_dim:2 * c_dim], out[:, 2 * c_dim:]
    return out[:, :c_dim], out[:, c_dim:]


# --------------------------------------------------------------------------
# Deterministic parameter init (synthetic — shapes from the module __init__)
# --------------------------------------------------------------------------
def init_params(key, C, KC, NL):
    ks = jax.random.split(key, 6 * NL + 6)
    i = 0
    layers = []
    for _ in range(NL):
        w = jax.random.normal(ks[i], (3, 3, C, C), jnp.float32) / np.sqrt(9 * C); i += 1
        b = 0.1 * jax.random.normal(ks[i], (C,), jnp.float32); i += 1
        g = 1.0 + 0.1 * jax.random.normal(ks[i], (C,), jnp.float32); i += 1
        be = 0.1 * jax.random.normal(ks[i], (C,), jnp.float32); i += 1
        rm = 0.1 * jax.random.normal(ks[i], (C,), jnp.float32); i += 1
        rv = 1.0 + 0.1 * jax.random.uniform(ks[i], (C,), jnp.float32); i += 1
        layers.append((w, b, g, be, rm, rv))
    w1 = jax.random.normal(ks[i], (1, 1, C, KC), jnp.float32) / np.sqrt(C); i += 1
    b1 = 0.1 * jax.random.normal(ks[i], (KC,), jnp.float32); i += 1
    g1 = 1.0 + 0.1 * jax.random.normal(ks[i], (KC,), jnp.float32); i += 1
    be1 = 0.1 * jax.random.normal(ks[i], (KC,), jnp.float32); i += 1
    rm1 = 0.1 * jax.random.normal(ks[i], (KC,), jnp.float32); i += 1
    rv1 = 1.0 + 0.1 * jax.random.uniform(ks[i], (KC,), jnp.float32); i += 1
    return layers, (w1, b1, g1, be1, rm1, rv1)


# --------------------------------------------------------------------------
# Fold parameters into per-layer lowered-conv matrices + per-column affines.
# Row/col index convention: c * PIX + (h * 4 + w)  (NCHW-flattened).
# --------------------------------------------------------------------------
def _shift_pattern():
    # S[t, p_out, p_in] = 1 iff input pixel p_in is tap t of output pixel
    # p_out for a 3x3 conv with pad=1 on a 4x4 grid (zero boundary).
    S = np.zeros((9, PIX, PIX), np.float32)
    for dy in range(3):
        for dx in range(3):
            t = dy * 3 + dx
            for h in range(HSP):
                for w in range(WSP):
                    hi, wi = h + dy - 1, w + dx - 1
                    if 0 <= hi < HSP and 0 <= wi < WSP:
                        S[t, h * WSP + w, hi * WSP + wi] = 1.0
    return S


def fold_params(layers, head, C, KC):
    """Fold conv bias + eval-mode BatchNorm into per-column affines, build the
    lowered-conv matrices (bf16), and the lowered 1x1 head (padded to a
    multiple of 128 output lanes if needed)."""
    S = jnp.asarray(_shift_pattern(), jnp.float32)         # (9, PIX, PIX)
    D = C * PIX

    wl, a3 = [], []
    for (w, b, g, be, rm, rv) in layers:
        Wt = w.reshape(9, C, C)                            # (t, c_in, c_out)
        # M[ci*PIX + pi, co*PIX + po] = sum_t Wt[t, ci, co] * S[t, po, pi]
        M = jnp.einsum('tio,tqp->ipoq', Wt, S).reshape(D, D)
        wl.append(M)
        scale = g / jnp.sqrt(rv + EPS)
        shift = be - rm * scale + scale * b
        a3.append(jnp.stack([jnp.repeat(scale, PIX), jnp.repeat(shift, PIX)]))
    wl_all = jnp.stack(wl).astype(jnp.bfloat16)            # (NL, D, D)
    a3_all = jnp.stack(a3).astype(jnp.float32)             # (NL, 2, D)

    (w1, b1, g1, be1, rm1, rv1) = head
    scale1 = g1 / jnp.sqrt(rv1 + EPS)
    shift1 = be1 - rm1 * scale1 + scale1 * b1
    W1 = w1.reshape(C, KC)                                 # (c_in, c_out)
    eye = jnp.eye(PIX, dtype=jnp.float32)
    # H[ci*PIX + p, co*PIX + p] = W1[ci, co]
    H = jnp.einsum('io,pq->ipoq', W1, eye).reshape(D, KC * PIX)
    DO = ((KC * PIX + 127) // 128) * 128                   # lane-dense (512 here)
    Hp = jnp.zeros((D, DO), jnp.float32).at[:, :KC * PIX].set(H).astype(jnp.bfloat16)
    ahp = (jnp.zeros((2, DO), jnp.float32)
           .at[0, :KC * PIX].set(jnp.repeat(scale1, PIX))
           .at[1, :KC * PIX].set(jnp.repeat(shift1, PIX)))
    return wl_all, a3_all, Hp, ahp


# --------------------------------------------------------------------------
# Pure-JAX f32 reference (NHWC) from the raw, un-folded parameters
# --------------------------------------------------------------------------
def ref_forward(x_nhwc, layers, head):
    dn = ('NHWC', 'HWIO', 'NHWC')
    e = x_nhwc
    for l, (w, b, g, be, rm, rv) in enumerate(layers):
        y = lax.conv_general_dilated(e, w, (1, 1), 'SAME', dimension_numbers=dn) + b
        y = (y - rm) / jnp.sqrt(rv + EPS) * g + be
        if l < len(layers) - 1:
            y = jax.nn.relu(y)
        e = y
    e = jax.nn.relu(e + x_nhwc)
    (w1, b1, g1, be1, rm1, rv1) = head
    z = lax.conv_general_dilated(e, w1, (1, 1), 'VALID', dimension_numbers=dn) + b1
    z = (z - rm1) / jnp.sqrt(rv1 + EPS) * g1 + be1
    return z


if __name__ == "__main__":
    B, hid_dim, c_dim, num_layers = 16, 32, 16, 2
    k = 2                      # ladder=False
    C, KC = hid_dim, k * c_dim

    key = jax.random.PRNGKey(0)
    kx, kp = jax.random.split(key)
    x_nchw = jax.random.normal(kx, (B, hid_dim, 4, 4), jnp.float32)

    layers, head = init_params(kp, C, KC, num_layers)
    wl_all, a3_all, whp, ahp = fold_params(layers, head, C, KC)

    mean, logvar = postpool(x_nchw, wl_all, a3_all, whp, ahp, c_dim, ladder=False)
    jax.block_until_ready((mean, logvar))

    # correctness check against a pure-f32 JAX reference
    # (tolerance accounts for bf16 matmul operands inside the kernel)
    x_nhwc = jnp.transpose(x_nchw, (0, 2, 3, 1))
    ref_nchw = jnp.transpose(ref_forward(x_nhwc, layers, head), (0, 3, 1, 2))
    ref_mean, ref_logvar = ref_nchw[:, :c_dim], ref_nchw[:, c_dim:]
    assert mean.shape == (B, c_dim, 4, 4) and logvar.shape == (B, c_dim, 4, 4)
    assert jnp.allclose(mean, ref_mean, rtol=5e-2, atol=5e-2)
    assert jnp.allclose(logvar, ref_logvar, rtol=5e-2, atol=5e-2)

    print("KERNEL_OK")
</pallas_src>

<mosaic_0001>
module attributes {stable_mosaic.version = 11 : i64} {
  func.func @postpool_kernel(%arg0: i32, %arg1: memref<8x512xf32, #tpu.memory_space<vmem>>, %arg2: memref<2x512x512xbf16, #tpu.memory_space<vmem>>, %arg3: memref<2x2x512xf32, #tpu.memory_space<vmem>>, %arg4: memref<512x512xbf16, #tpu.memory_space<vmem>>, %arg5: memref<2x512xf32, #tpu.memory_space<vmem>>, %arg6: memref<8x512xf32, #tpu.memory_space<vmem>>) attributes {dimension_semantics = [#tpu.dimension_semantics<parallel>], iteration_bounds = array<i64: 2>, scalar_prefetch = 0 : i64, scratch_operands = 0 : i64, tpu.core_type = #tpu.core_type<tc>, window_params = [{transform_indices = @transform_0, window_bounds = array<i64: 8, 512>}, {pipeline_mode = #tpu.pipeline_mode<synchronous>, transform_indices = @transform_1, window_bounds = array<i64: 2, 512, 512>}, {pipeline_mode = #tpu.pipeline_mode<synchronous>, transform_indices = @transform_2, window_bounds = array<i64: 2, 2, 512>}, {pipeline_mode = #tpu.pipeline_mode<synchronous>, transform_indices = @transform_3, window_bounds = array<i64: 512, 512>}, {pipeline_mode = #tpu.pipeline_mode<synchronous>, transform_indices = @transform_4, window_bounds = array<i64: 2, 512>}, {transform_indices = @transform_5, window_bounds = array<i64: 8, 512>}]} {
    %c0 = arith.constant 0 : index
    %c0_0 = arith.constant 0 : index
    %0 = vector.load %arg1[%c0, %c0_0] : memref<8x512xf32, #tpu.memory_space<vmem>>, vector<8x512xf32>
    %1 = arith.truncf %0 : vector<8x512xf32> to vector<8x512xbf16>
    %c0_1 = arith.constant 0 : index
    %c0_2 = arith.constant 0 : index
    %c0_3 = arith.constant 0 : index
    %2 = vector.load %arg2[%c0_1, %c0_2, %c0_3] : memref<2x512x512xbf16, #tpu.memory_space<vmem>>, vector<1x512x512xbf16>
    %3 = vector.shape_cast %2 : vector<1x512x512xbf16> to vector<512x512xbf16>
    %cst = arith.constant dense<0.000000e+00> : vector<8x512xf32>
    %4 = tpu.matmul %1, %3, %cst {dimension_numbers = #tpu.dot_dimension_numbers<[1], [0], [0], [1], [0, 0, 1, 1], [], []>} : vector<8x512xbf16>, vector<512x512xbf16>, vector<8x512xf32> -> vector<8x512xf32>
    %c0_4 = arith.constant 0 : index
    %c0_5 = arith.constant 0 : index
    %c0_6 = arith.constant 0 : index
    %5 = vector.load %arg3[%c0_4, %c0_5, %c0_6] : memref<2x2x512xf32, #tpu.memory_space<vmem>>, vector<1x1x512xf32>
    %6 = vector.shape_cast %5 : vector<1x1x512xf32> to vector<1x512xf32>
    %7 = vector.broadcast %6 : vector<1x512xf32> to vector<8x512xf32>
    %8 = arith.mulf %4, %7 : vector<8x512xf32>
    %c0_7 = arith.constant 0 : index
    %c1 = arith.constant 1 : index
    %c0_8 = arith.constant 0 : index
    %9 = vector.load %arg3[%c0_7, %c1, %c0_8] : memref<2x2x512xf32, #tpu.memory_space<vmem>>, vector<1x1x512xf32>
    %10 = vector.shape_cast %9 : vector<1x1x512xf32> to vector<1x512xf32>
    %11 = vector.broadcast %10 : vector<1x512xf32> to vector<8x512xf32>
    %12 = arith.addf %8, %11 : vector<8x512xf32>
    %cst_9 = arith.constant 0.000000e+00 : f32
    %13 = vector.broadcast %cst_9 : f32 to vector<8x512xf32>
    %14 = arith.maximumf %12, %13 : vector<8x512xf32>
    %15 = arith.truncf %14 : vector<8x512xf32> to vector<8x512xbf16>
    %c1_10 = arith.constant 1 : index
    %c0_11 = arith.constant 0 : index
    %c0_12 = arith.constant 0 : index
    %16 = vector.load %arg2[%c1_10, %c0_11, %c0_12] : memref<2x512x512xbf16, #tpu.memory_space<vmem>>, vector<1x512x512xbf16>
    %17 = vector.shape_cast %16 : vector<1x512x512xbf16> to vector<512x512xbf16>
    %cst_13 = arith.constant dense<0.000000e+00> : vector<8x512xf32>
    %18 = tpu.matmul %15, %17, %cst_13 {dimension_numbers = #tpu.dot_dimension_numbers<[1], [0], [0], [1], [0, 0, 1, 1], [], []>} : vector<8x512xbf16>, vector<512x512xbf16>, vector<8x512xf32> -> vector<8x512xf32>
    %c1_14 = arith.constant 1 : index
    %c0_15 = arith.constant 0 : index
    %c0_16 = arith.constant 0 : index
    %19 = vector.load %arg3[%c1_14, %c0_15, %c0_16] : memref<2x2x512xf32, #tpu.memory_space<vmem>>, vector<1x1x512xf32>
    %20 = vector.shape_cast %19 : vector<1x1x512xf32> to vector<1x512xf32>
    %21 = vector.broadcast %20 : vector<1x512xf32> to vector<8x512xf32>
    %22 = arith.mulf %18, %21 : vector<8x512xf32>
    %c1_17 = arith.constant 1 : index
    %c1_18 = arith.constant 1 : index
    %c0_19 = arith.constant 0 : index
    %23 = vector.load %arg3[%c1_17, %c1_18, %c0_19] : memref<2x2x512xf32, #tpu.memory_space<vmem>>, vector<1x1x512xf32>
    %24 = vector.shape_cast %23 : vector<1x1x512xf32> to vector<1x512xf32>
    %25 = vector.broadcast %24 : vector<1x512xf32> to vector<8x512xf32>
    %26 = arith.addf %22, %25 : vector<8x512xf32>
    %27 = arith.addf %26, %0 : vector<8x512xf32>
    %cst_20 = arith.constant 0.000000e+00 : f32
    %28 = vector.broadcast %cst_20 : f32 to vector<8x512xf32>
    %29 = arith.maximumf %27, %28 : vector<8x512xf32>
    %30 = arith.truncf %29 : vector<8x512xf32> to vector<8x512xbf16>
    %c0_21 = arith.constant 0 : index
    %c0_22 = arith.constant 0 : index
    %31 = vector.load %arg4[%c0_21, %c0_22] : memref<512x512xbf16, #tpu.memory_space<vmem>>, vector<512x512xbf16>
    %cst_23 = arith.constant dense<0.000000e+00> : vector<8x512xf32>
    %32 = tpu.matmul %30, %31, %cst_23 {dimension_numbers = #tpu.dot_dimension_numbers<[1], [0], [0], [1], [0, 0, 1, 1], [], []>} : vector<8x512xbf16>, vector<512x512xbf16>, vector<8x512xf32> -> vector<8x512xf32>
    %c0_24 = arith.constant 0 : index
    %c0_25 = arith.constant 0 : index
    %33 = vector.load %arg5[%c0_24, %c0_25] : memref<2x512xf32, #tpu.memory_space<vmem>>, vector<1x512xf32>
    %34 = vector.broadcast %33 : vector<1x512xf32> to vector<8x512xf32>
    %35 = arith.mulf %32, %34 : vector<8x512xf32>
    %c1_26 = arith.constant 1 : index
    %c0_27 = arith.constant 0 : index
    %36 = vector.load %arg5[%c1_26, %c0_27] : memref<2x512xf32, #tpu.memory_space<vmem>>, vector<1x512xf32>
    %37 = vector.broadcast %36 : vector<1x512xf32> to vector<8x512xf32>
    %38 = arith.addf %35, %37 : vector<8x512xf32>
    %c0_28 = arith.constant 0 : index
    %c0_29 = arith.constant 0 : index
    %39 = vector.load %arg6[%c0_28, %c0_29] : memref<8x512xf32, #tpu.memory_space<vmem>>, vector<8x512xf32>
    tpu.vector_store %arg6[%c0_28, %c0_29], %38 {strides = array<i32>} : memref<8x512xf32, #tpu.memory_space<vmem>>, vector<8x512xf32>,
    return
  }
  func.func @transform_0(%arg0: i32) -> (i32, i32) {
    %c0_i32 = arith.constant 0 : i32
    %c0_i32_0 = arith.constant 0 : i32
    return %arg0, %c0_i32 : i32, i32
  }
  func.func @transform_1(%arg0: i32) -> (i32, i32, i32) {
    %c0_i32 = arith.constant 0 : i32
    %c0_i32_0 = arith.constant 0 : i32
    %c0_i32_1 = arith.constant 0 : i32
    %c0_i32_2 = arith.constant 0 : i32
    return %c0_i32, %c0_i32_0, %c0_i32_1 : i32, i32, i32
  }
  func.func @transform_2(%arg0: i32) -> (i32, i32, i32) {
    %c0_i32 = arith.constant 0 : i32
    %c0_i32_0 = arith.constant 0 : i32
    %c0_i32_1 = arith.constant 0 : i32
    %c0_i32_2 = arith.constant 0 : i32
    return %c0_i32, %c0_i32_0, %c0_i32_1 : i32, i32, i32
  }
  func.func @transform_3(%arg0: i32) -> (i32, i32) {
    %c0_i32 = arith.constant 0 : i32
    %c0_i32_0 = arith.constant 0 : i32
    %c0_i32_1 = arith.constant 0 : i32
    return %c0_i32, %c0_i32_0 : i32, i32
  }
  func.func @transform_4(%arg0: i32) -> (i32, i32) {
    %c0_i32 = arith.constant 0 : i32
    %c0_i32_0 = arith.constant 0 : i32
    %c0_i32_1 = arith.constant 0 : i32
    return %c0_i32, %c0_i32_0 : i32, i32
  }
  func.func @transform_5(%arg0: i32) -> (i32, i32) {
    %c0_i32 = arith.constant 0 : i32
    %c0_i32_0 = arith.constant 0 : i32
    return %arg0, %c0_i32 : i32, i32
  }
}

</mosaic_0001>

<llo_original>
// kernel: tpu_custom_call.1
$region0: #{tpu_custom_call.1}
  #allocation0 [shape = 'u32[]', space=smem, size = 0x4, offset = 0x4, fixed_abs, tag = 'smem constant byte address 0x4 - core index']
  #allocation1 [shape = 'u32[144,128]{1,0:T(1,128)}', space=vmem, size = 0x12000, scoped, tag = 'internal scratch']
  %s0 = inlined_call_operand.hbm [shape: f32[16,512], index: 0, kind: input, shape index: {}]
  %s1 = inlined_call_operand.hbm [shape: bf16[2,512,512], index: 1, kind: input, shape index: {}]
  %s2 = inlined_call_operand.hbm [shape: f32[2,2,512], index: 2, kind: input, shape index: {}]
  %s3 = inlined_call_operand.hbm [shape: bf16[512,512], index: 3, kind: input, shape index: {}]
  %s4 = inlined_call_operand.vmem [shape: f32[2,512], index: 4, kind: input, shape index: {}]
  %s5 = inlined_call_operand.hbm [shape: f32[16,512], index: 5, kind: output, shape index: {}]
  %s6 = sld [smem:[#allocation0]]
  $region69: #{tpu_custom_call.1} parent=0
    _
  %s8 = ssub.s32 1, %s6
  %s9 = scalar_select 0, %s8, %s6
  $region1: #{tpu_custom_call.1} parent=0
    #allocation2 [shape = 'u8[32768]{0}', space=vmem, size = 0x8000, scoped, tag = 'input window, operand 0']
    #allocation3 [shape = 's32[2]{0}', space=sflag, size = 0x8, scoped, tag = 'scoped memory for tpu_custom_call.1']
    #allocation4 [shape = 's32[2]{0}', space=sflag, size = 0x8, scoped, tag = 'scoped memory for tpu_custom_call.1']
    #allocation5 [shape = 'u8[1048576]{0}', space=vmem, size = 0x100000, scoped, tag = 'input window, operand 1, single buffered']
    #allocation6 [shape = 's32[1]{0}', space=sflag, size = 0x4, scoped, tag = 'scoped memory for tpu_custom_call.1']
    #allocation7 [shape = 'u8[8192]{0}', space=vmem, size = 0x2000, scoped, tag = 'input window, operand 2, single buffered']
    #allocation8 [shape = 'u8[524288]{0}', space=vmem, size = 0x80000, scoped, tag = 'input window, operand 3, single buffered']
    #allocation9 [shape = 's32[1]{0}', space=sflag, size = 0x4, scoped, tag = 'scoped memory for tpu_custom_call.1']
    #allocation10 [shape = 'u8[32768]{0}', space=vmem, size = 0x8000, scoped, tag = 'output window, operand 0']
    %10 = vsyncpa [#allocation3], 0
    %s11 = scalar_lea.sflag [#allocation3], 1
    %12 = vsyncpa %s11, 0
    %13 = vsyncpa [#allocation6], 0
    %14 = vsyncpa [#allocation9], 0
    %15 = vsyncpa [#allocation4], 0
    %s16 = scalar_lea.sflag [#allocation4], 1
    %17 = vsyncpa %s16, 0
    loop: start=0, step=1, limit=4
    $region2: #{tpu_custom_call.1} parent=1 // loop_pre_header
      _
    $region3: #{tpu_custom_call.1} parent=1 // loop_header
      %s19 = sphi 0, %s23
      %p20 = scmp.ge.s32.totalorder %s19, 4
      %s29 = sphi 0, %s31
      %s32 = sphi 0, %s29
      %s33 = sphi 0, %s32
      %s49 = sphi 0, %s33
      %s53 = sphi 0, %s53
      %s55 = sphi 0, %s53
      %s56 = sphi 0, %s55
      %s70 = sphi 0, %s56
      %s74 = sphi 0, %s74
      %s76 = sphi 0, %s74
      %s77 = sphi 0, %s76
      %s91 = sphi 0, %s77
      %s95 = sphi 0, %s95
      %s97 = sphi 0, %s95
      %s98 = sphi 0, %s97
      %s112 = sphi 0, %s98
      %s116 = sphi 0, %s116
      %s118 = sphi 0, %s116
      %s119 = sphi 0, %s118
      %s133 = sphi 0, %s119
      %s139 = sphi 0, %s141
      %s142 = sphi 0, %s139
      %s143 = sphi 0, %s142
      %s159 = sphi 0, %s143
    $region4: #{tpu_custom_call.1} parent=1 // loop_header_branch
      %22 = sbr.rel (%p20) target = $region8
    $region5: #{tpu_custom_call.1} parent=1 // loop_body
      %s24 = ssub.s32 %s19, 1
      %s25 = ssub.s32 %s19, 2
      %s26 = sadd.s32 %s19, 1
      %s27 = ssub.s32 %s19, %s26
      %p28 = scmp.eq.s32.totalorder %s27, 0
      %s30 = sadd.s32 %s29, 1
      %s31 = scalar_select %p28, %s29, %s30
      %p34 = pneg %p28
      %p35 = scmp.eq.s32.totalorder %s19, 1
      %p36 = por %p34, %p35
      %p37 = scmp.ne.s32.totalorder %s29, %s32
      %p38 = scmp.eq.s32.totalorder %s19, 0
      %p39 = por %p37, %p38
      %p40 = scmp.ne.s32.totalorder %s29, %s32
      %p41 = scmp.eq.s32.totalorder %s24, 1
      %p42 = por %p40, %p41
      %p43 = scmp.ne.s32.totalorder %s32, %s33
      %p44 = scmp.eq.s32.totalorder %s24, 0
      %p45 = por %p43, %p44
      %p46 = scmp.ne.s32.totalorder %s32, %s33
      %p47 = scmp.eq.s32.totalorder %s25, 1
      %p48 = por %p46, %p47
      %p50 = scmp.ne.s32.totalorder %s33, %s49
      %p51 = scmp.eq.s32.totalorder %s25, 0
      %p52 = por %p50, %p51
      %s54 = sadd.s32 %s53, 1
      %p57 = scmp.eq.s32.totalorder %s19, 1
      %p58 = scmp.ne.s32.totalorder %s53, %s55
      %p59 = scmp.eq.s32.totalorder %s19, 0
      %p60 = por %p58, %p59
      %p61 = scmp.ne.s32.totalorder %s53, %s55
      %p62 = scmp.eq.s32.totalorder %s24, 1
      %p63 = por %p61, %p62
      %p64 = scmp.ne.s32.totalorder %s55, %s56
      %p65 = scmp.eq.s32.totalorder %s24, 0
      %p66 = por %p64, %p65
      %p67 = scmp.ne.s32.totalorder %s55, %s56
      %p68 = scmp.eq.s32.totalorder %s25, 1
      %p69 = por %p67, %p68
      %p71 = scmp.ne.s32.totalorder %s56, %s70
      %p72 = scmp.eq.s32.totalorder %s25, 0
      %p73 = por %p71, %p72
      %s75 = sadd.s32 %s74, 1
      %p78 = scmp.eq.s32.totalorder %s19, 1
      %p79 = scmp.ne.s32.totalorder %s74, %s76
      %p80 = scmp.eq.s32.totalorder %s19, 0
      %p81 = por %p79, %p80
      %p82 = scmp.ne.s32.totalorder %s74, %s76
      %p83 = scmp.eq.s32.totalorder %s24, 1
      %p84 = por %p82, %p83
      %p85 = scmp.ne.s32.totalorder %s76, %s77
      %p86 = scmp.eq.s32.totalorder %s24, 0
      %p87 = por %p85, %p86
      %p88 = scmp.ne.s32.totalorder %s76, %s77
      %p89 = scmp.eq.s32.totalorder %s25, 1
      %p90 = por %p88, %p89
      %p92 = scmp.ne.s32.totalorder %s77, %s91
      %p93 = scmp.eq.s32.totalorder %s25, 0
      %p94 = por %p92, %p93
      %s96 = sadd.s32 %s95, 1
      %p99 = scmp.eq.s32.totalorder %s19, 1
      %p100 = scmp.ne.s32.totalorder %s95, %s97
      %p101 = scmp.eq.s32.totalorder %s19, 0
      %p102 = por %p100, %p101
      %p103 = scmp.ne.s32.totalorder %s95, %s97
      %p104 = scmp.eq.s32.totalorder %s24, 1
      %p105 = por %p103, %p104
      %p106 = scmp.ne.s32.totalorder %s97, %s98
      %p107 = scmp.eq.s32.totalorder %s24, 0
      %p108 = por %p106, %p107
      %p109 = scmp.ne.s32.totalorder %s97, %s98
      %p110 = scmp.eq.s32.totalorder %s25, 1
      %p111 = por %p109, %p110
      %p113 = scmp.ne.s32.totalorder %s98, %s112
      %p114 = scmp.eq.s32.totalorder %s25, 0
      %p115 = por %p113, %p114
      %s117 = sadd.s32 %s116, 1
      %p120 = scmp.eq.s32.totalorder %s19, 1
      %p121 = scmp.ne.s32.totalorder %s116, %s118
      %p122 = scmp.eq.s32.totalorder %s19, 0
      %p123 = por %p121, %p122
      %p124 = scmp.ne.s32.totalorder %s116, %s118
      %p125 = scmp.eq.s32.totalorder %s24, 1
      %p126 = por %p124, %p125
      %p127 = scmp.ne.s32.totalorder %s118, %s119
      %p128 = scmp.eq.s32.totalorder %s24, 0
      %p129 = por %p127, %p128
      %p130 = scmp.ne.s32.totalorder %s118, %s119
      %p131 = scmp.eq.s32.totalorder %s25, 1
      %p132 = por %p130, %p131
      %p134 = scmp.ne.s32.totalorder %s119, %s133
      %p135 = scmp.eq.s32.totalorder %s25, 0
      %p136 = por %p134, %p135
      %s137 = ssub.s32 %s19, %s26
      %p138 = scmp.eq.s32.totalorder %s137, 0
      %s140 = sadd.s32 %s139, 1
      %s141 = scalar_select %p138, %s139, %s140
      %p144 = pneg %p138
      %p145 = scmp.eq.s32.totalorder %s19, 1
      %p146 = por %p144, %p145
      %p147 = scmp.ne.s32.totalorder %s139, %s142
      %p148 = scmp.eq.s32.totalorder %s19, 0
      %p149 = por %p147, %p148
      %p150 = scmp.ne.s32.totalorder %s139, %s142
      %p151 = scmp.eq.s32.totalorder %s24, 1
      %p152 = por %p150, %p151
      %p153 = scmp.ne.s32.totalorder %s142, %s143
      %p154 = scmp.eq.s32.totalorder %s24, 0
      %p155 = por %p153, %p154
      %p156 = scmp.ne.s32.totalorder %s142, %s143
      %p157 = scmp.eq.s32.totalorder %s25, 1
      %p158 = por %p156, %p157
      %p160 = scmp.ne.s32.totalorder %s143, %s159
      %p161 = scmp.eq.s32.totalorder %s25, 0
      %p162 = por %p160, %p161
      %p163 = scmp.le.s32.totalorder 1, %s19
      %p164 = scmp.lt.s32.totalorder %s19, 3
      %p165 = pnand %p163, %p164
      %p166 = pneg %p165
      // Predicated region
      $region9: #{tpu_custom_call.1} parent=5 // pred_check
        _
      $region10: #{tpu_custom_call.1} parent=5 // pred_check_branch
        %168 = sbr.rel (%p165) target = $region12
      $region11: #{tpu_custom_call.1} parent=5 // pred_region
        %s169 = ssub.s32 %s19, 1
        // Predicated region
        $region13: #{tpu_custom_call.1} parent=11 // pred_check
          %p170 = pneg %p66
        $region14: #{tpu_custom_call.1} parent=11 // pred_check_branch
          %172 = sbr.rel (%p170) target = $region16
        $region15: #{tpu_custom_call.1} parent=11 // pred_region
          %s174 = ssub.s32 32768, 32768
          %175 = vsyncadd [#allocation6], %s174
          %s176 = sshll.u32 [#allocation5], 4
          %s177 = int_to_ptr.vmem [resolvable:$true] %s176
          %182 = dma.hbm_to_vmem [thread:$0]  %s1, 32768, %s177, [#allocation6], 256, 256, 16
        $region16: #{tpu_custom_call.1} parent=11 // pred_fallthru
          _
        // Predicated region
        $region17: #{tpu_custom_call.1} parent=11 // pred_check
          %p183 = pneg %p87
        $region18: #{tpu_custom_call.1} parent=11 // pred_check_branch
          %185 = sbr.rel (%p183) target = $region20
        $region19: #{tpu_custom_call.1} parent=11 // pred_region
          %s187 = ssub.s32 256, 256
          %188 = vsyncadd [#allocation6], %s187
          %s189 = sshll.u32 [#allocation7], 4
          %s190 = int_to_ptr.vmem [resolvable:$true] %s189
          %195 = dma.hbm_to_vmem [thread:$0]  %s2, 256, %s190, [#allocation6], 128, 128, 8
        $region20: #{tpu_custom_call.1} parent=11 // pred_fallthru
          _
        // Predicated region
        $region21: #{tpu_custom_call.1} parent=11 // pred_check
          %p196 = pneg %p108
        $region22: #{tpu_custom_call.1} parent=11 // pred_check_branch
          %198 = sbr.rel (%p196) target = $region24
        $region23: #{tpu_custom_call.1} parent=11 // pred_region
          %s200 = ssub.s32 16384, 16384
          %201 = vsyncadd [#allocation9], %s200
          %s202 = sshll.u32 [#allocation8], 4
          %s203 = int_to_ptr.vmem [resolvable:$true] %s202
          %208 = dma.hbm_to_vmem [thread:$0]  %s3, 16384, %s203, [#allocation9], 256, 256, 16
        $region24: #{tpu_custom_call.1} parent=11 // pred_fallthru
          _
        // Predicated region
        $region25: #{tpu_custom_call.1} parent=11 // pred_check
          %p209 = pneg %p129
        $region26: #{tpu_custom_call.1} parent=11 // pred_check_branch
          %211 = sbr.rel (%p209) target = $region28
        $region27: #{tpu_custom_call.1} parent=11 // pred_region
          _
        $region28: #{tpu_custom_call.1} parent=11 // pred_fallthru
          _
      $region12: #{tpu_custom_call.1} parent=5 // pred_fallthru
        _
      %p212 = scmp.lt.s32.totalorder %s19, 2
      // Predicated region
      $region29: #{tpu_custom_call.1} parent=5 // pred_check
        %p213 = pneg %p212
      $region30: #{tpu_custom_call.1} parent=5 // pred_check_branch
        %215 = sbr.rel (%p213) target = $region32
      $region31: #{tpu_custom_call.1} parent=5 // pred_region
        // Predicated region
        $region33: #{tpu_custom_call.1} parent=31 // pred_check
          %p216 = pneg %p39
        $region34: #{tpu_custom_call.1} parent=31 // pred_check_branch
          %218 = sbr.rel (%p216) target = $region36
        $region35: #{tpu_custom_call.1} parent=31 // pred_region
          %s219 = sand.u32 %s29, 1
          %s220 = scalar_lea.sflag [#allocation3], %s219
          %s221 = sand.u32 %s29, 1
          %s222 = smul.addr %s221, 32
          %s223 = scalar_lea.vmem [#allocation2], %s222
          %s225 = ssub.s32 512, 512
          %226 = vsyncadd %s220, %s225
          %s227 = smul.addr %s19, 4
          %s228 = smul.addr %s227, 128
          %s229 = scalar_lea.hbm %s0, %s228
          %s231 = sshll.u32 %s223, 4
          %s232 = int_to_ptr.vmem [resolvable:$true] %s231
          %234 = dma.hbm_to_vmem [thread:$0]  %s229, 512, %s232, %s220
        $region36: #{tpu_custom_call.1} parent=31 // pred_fallthru
          _
      $region32: #{tpu_custom_call.1} parent=5 // pred_fallthru
        _
      %p235 = scmp.le.s32.totalorder 1, %s19
      %p236 = scmp.lt.s32.totalorder %s19, 3
      %p237 = pnand %p235, %p236
      %p238 = pneg %p237
      // Predicated region
      $region37: #{tpu_custom_call.1} parent=5 // pred_check
        _
      $region38: #{tpu_custom_call.1} parent=5 // pred_check_branch
        %240 = sbr.rel (%p237) target = $region40
      $region39: #{tpu_custom_call.1} parent=5 // pred_region
        %s241 = ssub.s32 %s19, 1
        %s242 = sand.u32 %s32, 1
        %s243 = scalar_lea.sflag [#allocation3], %s242
        %s244 = sand.u32 %s32, 1
        %s245 = smul.addr %s244, 32
        %s246 = scalar_lea.vmem [#allocation2], %s245
        // Predicated region
        $region41: #{tpu_custom_call.1} parent=39 // pred_check
          %p247 = pneg %p45
        $region42: #{tpu_custom_call.1} parent=39 // pred_check_branch
          %249 = sbr.rel (%p247) target = $region44
        $region43: #{tpu_custom_call.1} parent=39 // pred_region
          %250 = dma.done %s243, 512
        $region44: #{tpu_custom_call.1} parent=39 // pred_fallthru
          _
        // Predicated region
        $region45: #{tpu_custom_call.1} parent=39 // pred_check
          %p251 = pneg %p66
        $region46: #{tpu_custom_call.1} parent=39 // pred_check_branch
          %253 = sbr.rel (%p251) target = $region48
        $region47: #{tpu_custom_call.1} parent=39 // pred_region
          %254 = dma.done [#allocation6], 32768
        $region48: #{tpu_custom_call.1} parent=39 // pred_fallthru
          _
        // Predicated region
        $region49: #{tpu_custom_call.1} parent=39 // pred_check
          %p255 = pneg %p87
        $region50: #{tpu_custom_call.1} parent=39 // pred_check_branch
          %257 = sbr.rel (%p255) target = $region52
        $region51: #{tpu_custom_call.1} parent=39 // pred_region
          %258 = dma.done [#allocation6], 256
        $region52: #{tpu_custom_call.1} parent=39 // pred_fallthru
          _
        // Predicated region
        $region53: #{tpu_custom_call.1} parent=39 // pred_check
          %p259 = pneg %p108
        $region54: #{tpu_custom_call.1} parent=39 // pred_check_branch
          %261 = sbr.rel (%p259) target = $region56
        $region55: #{tpu_custom_call.1} parent=39 // pred_region
          %262 = dma.done [#allocation9], 16384
        $region56: #{tpu_custom_call.1} parent=39 // pred_fallthru
          _
        %s263 = sand.u32 %s32, 1
        %s264 = scalar_lea.sflag [#allocation3], %s263
        %s265 = sand.u32 %s32, 1
        %s266 = smul.addr %s265, 32
        %s267 = scalar_lea.vmem [#allocation2], %s266
        %p268 = pneg %p45
        %p269 = pneg %p42
        %p270 = pneg %p66
        %p271 = pneg %p63
        %p272 = pneg %p87
        %p273 = pneg %p84
        %p274 = pneg %p108
        %p275 = pneg %p105
        %p276 = pneg %p129
        %p277 = pneg %p126
        %p278 = pneg %p155
        %p279 = pneg %p152
        %s280 = sand.u32 %s142, 1
        %s281 = scalar_lea.sflag [#allocation4], %s280
        %s282 = sand.u32 %s142, 1
        %s283 = smul.addr %s282, 32
        %s284 = scalar_lea.vmem [#allocation10], %s283
        %v285 = vld [vmem:[%s246] sm:$0xff]
        %v286 = vld [vmem:[%s246 + $0x8] sm:$0xff]
        %v287 = vld [vmem:[%s246 + $0x10] sm:$0xff]
        %v288 = vld [vmem:[%s246 + $0x18] sm:$0xff]
        %v289 = vpack.c.bf16 %v285, %v285
        %v290 = vpack.c.bf16 %v286, %v286
        %v291 = vpack.c.bf16 %v287, %v287
        %v292 = vpack.c.bf16 %v288, %v288
        %v293 = vld [vmem:[#allocation5] sm:$0xff]
        %v294 = vld [vmem:[#allocation5 + $0x8] sm:$0xff]
        %v295 = vld [vmem:[#allocation5 + $0x10] sm:$0xff]
        %v296 = vld [vmem:[#allocation5 + $0x18] sm:$0xff]
        %v297 = vld [vmem:[#allocation5 + $0x20] sm:$0xff]
        %v298 = vld [vmem:[#allocation5 + $0x28] sm:$0xff]
        %v299 = vld [vmem:[#allocation5 + $0x30] sm:$0xff]
        %v300 = vld [vmem:[#allocation5 + $0x38] sm:$0xff]
        %v301 = vld [vmem:[#allocation5 + $0x40] sm:$0xff]
        %v302 = vld [vmem:[#allocation5 + $0x48] sm:$0xff]
        %v303 = vld [vmem:[#allocation5 + $0x50] sm:$0xff]
        %v304 = vld [vmem:[#allocation5 + $0x58] sm:$0xff]
        %v305 = vld [vmem:[#allocation5 + $0x60] sm:$0xff]
        %v306 = vld [vmem:[#allocation5 + $0x68] sm:$0xff]
        %v307 = vld [vmem:[#allocation5 + $0x70] sm:$0xff]
        %v308 = vld [vmem:[#allocation5 + $0x78] sm:$0xff]
        %v309 = vld [vmem:[#allocation5 + $0x80] sm:$0xff]
        %v310 = vld [vmem:[#allocation5 + $0x88] sm:$0xff]
        %v311 = vld [vmem:[#allocation5 + $0x90] sm:$0xff]
        %v312 = vld [vmem:[#allocation5 + $0x98] sm:$0xff]
        %v313 = vld [vmem:[#allocation5 + $0xa0] sm:$0xff]
        %v314 = vld [vmem:[#allocation5 + $0xa8] sm:$0xff]
        %v315 = vld [vmem:[#allocation5 + $0xb0] sm:$0xff]
        %v316 = vld [vmem:[#allocation5 + $0xb8] sm:$0xff]
        %v317 = vld [vmem:[#allocation5 + $0xc0] sm:$0xff]
        %v318 = vld [vmem:[#allocation5 + $0xc8] sm:$0xff]
        %v319 = vld [vmem:[#allocation5 + $0xd0] sm:$0xff]
        %v320 = vld [vmem:[#allocation5 + $0xd8] sm:$0xff]
        %v321 = vld [vmem:[#allocation5 + $0xe0] sm:$0xff]
        %v322 = vld [vmem:[#allocation5 + $0xe8] sm:$0xff]
        %v323 = vld [vmem:[#allocation5 + $0xf0] sm:$0xff]
        %v324 = vld [vmem:[#allocation5 + $0xf8] sm:$0xff]
        %v325 = vld [vmem:[#allocation5 + $0x100] sm:$0xff]
        %v326 = vld [vmem:[#allocation5 + $0x108] sm:$0xff]
        %v327 = vld [vmem:[#allocation5 + $0x110] sm:$0xff]
        %v328 = vld [vmem:[#allocation5 + $0x118] sm:$0xff]
        %v329 = vld [vmem:[#allocation5 + $0x120] sm:$0xff]
        %v330 = vld [vmem:[#allocation5 + $0x128] sm:$0xff]
        %v331 = vld [vmem:[#allocation5 + $0x130] sm:$0xff]
        %v332 = vld [vmem:[#allocation5 + $0x138] sm:$0xff]
        %v333 = vld [vmem:[#allocation5 + $0x140] sm:$0xff]
        %v334 = vld [vmem:[#allocation5 + $0x148] sm:$0xff]
        %v335 = vld [vmem:[#allocation5 + $0x150] sm:$0xff]
        %v336 = vld [vmem:[#allocation5 + $0x158] sm:$0xff]
        %v337 = vld [vmem:[#allocation5 + $0x160] sm:$0xff]
        %v338 = vld [vmem:[#allocation5 + $0x168] sm:$0xff]
        %v339 = vld [vmem:[#allocation5 + $0x170] sm:$0xff]
        %v340 = vld [vmem:[#allocation5 + $0x178] sm:$0xff]
        %v341 = vld [vmem:[#allocation5 + $0x180] sm:$0xff]
        %v342 = vld [vmem:[#allocation5 + $0x188] sm:$0xff]
        %v343 = vld [vmem:[#allocation5 + $0x190] sm:$0xff]
        %v344 = vld [vmem:[#allocation5 + $0x198] sm:$0xff]
        %v345 = vld [vmem:[#allocation5 + $0x1a0] sm:$0xff]
        %v346 = vld [vmem:[#allocation5 + $0x1a8] sm:$0xff]
        %v347 = vld [vmem:[#allocation5 + $0x1b0] sm:$0xff]
        %v348 = vld [vmem:[#allocation5 + $0x1b8] sm:$0xff]
        %v349 = vld [vmem:[#allocation5 + $0x1c0] sm:$0xff]
        %v350 = vld [vmem:[#allocation5 + $0x1c8] sm:$0xff]
        %v351 = vld [vmem:[#allocation5 + $0x1d0] sm:$0xff]
        %v352 = vld [vmem:[#allocation5 + $0x1d8] sm:$0xff]
        %v353 = vld [vmem:[#allocation5 + $0x1e0] sm:$0xff]
        %v354 = vld [vmem:[#allocation5 + $0x1e8] sm:$0xff]
        %v355 = vld [vmem:[#allocation5 + $0x1f0] sm:$0xff]
        %v356 = vld [vmem:[#allocation5 + $0x1f8] sm:$0xff]
        %v357 = vld [vmem:[#allocation5 + $0x200] sm:$0xff]
        %v358 = vld [vmem:[#allocation5 + $0x208] sm:$0xff]
        %v359 = vld [vmem:[#allocation5 + $0x210] sm:$0xff]
        %v360 = vld [vmem:[#allocation5 + $0x218] sm:$0xff]
        %v361 = vld [vmem:[#allocation5 + $0x220] sm:$0xff]
        %v362 = vld [vmem:[#allocation5 + $0x228] sm:$0xff]
        %v363 = vld [vmem:[#allocation5 + $0x230] sm:$0xff]
        %v364 = vld [vmem:[#allocation5 + $0x238] sm:$0xff]
        %v365 = vld [vmem:[#allocation5 + $0x240] sm:$0xff]
        %v366 = vld [vmem:[#allocation5 + $0x248] sm:$0xff]
        %v367 = vld [vmem:[#allocation5 + $0x250] sm:$0xff]
        %v368 = vld [vmem:[#allocation5 + $0x258] sm:$0xff]
        %v369 = vld [vmem:[#allocation5 + $0x260] sm:$0xff]
        %v370 = vld [vmem:[#allocation5 + $0x268] sm:$0xff]
        %v371 = vld [vmem:[#allocation5 + $0x270] sm:$0xff]
        %v372 = vld [vmem:[#allocation5 + $0x278] sm:$0xff]
        %v373 = vld [vmem:[#allocation5 + $0x280] sm:$0xff]
        %v374 = vld [vmem:[#allocation5 + $0x288] sm:$0xff]
        %v375 = vld [vmem:[#allocation5 + $0x290] sm:$0xff]
        %v376 = vld [vmem:[#allocation5 + $0x298] sm:$0xff]
        %v377 = vld [vmem:[#allocation5 + $0x2a0] sm:$0xff]
        %v378 = vld [vmem:[#allocation5 + $0x2a8] sm:$0xff]
        %v379 = vld [vmem:[#allocation5 + $0x2b0] sm:$0xff]
        %v380 = vld [vmem:[#allocation5 + $0x2b8] sm:$0xff]
        %v381 = vld [vmem:[#allocation5 + $0x2c0] sm:$0xff]
        %v382 = vld [vmem:[#allocation5 + $0x2c8] sm:$0xff]
        %v383 = vld [vmem:[#allocation5 + $0x2d0] sm:$0xff]
        %v384 = vld [vmem:[#allocation5 + $0x2d8] sm:$0xff]
        %v385 = vld [vmem:[#allocation5 + $0x2e0] sm:$0xff]
        %v386 = vld [vmem:[#allocation5 + $0x2e8] sm:$0xff]
        %v387 = vld [vmem:[#allocation5 + $0x2f0] sm:$0xff]
        %v388 = vld [vmem:[#allocation5 + $0x2f8] sm:$0xff]
        %v389 = vld [vmem:[#allocation5 + $0x300] sm:$0xff]
        %v390 = vld [vmem:[#allocation5 + $0x308] sm:$0xff]
        %v391 = vld [vmem:[#allocation5 + $0x310] sm:$0xff]
        %v392 = vld [vmem:[#allocation5 + $0x318] sm:$0xff]
        %v393 = vld [vmem:[#allocation5 + $0x320] sm:$0xff]
        %v394 = vld [vmem:[#allocation5 + $0x328] sm:$0xff]
        %v395 = vld [vmem:[#allocation5 + $0x330] sm:$0xff]
        %v396 = vld [vmem:[#allocation5 + $0x338] sm:$0xff]
        %v397 = vld [vmem:[#allocation5 + $0x340] sm:$0xff]
        %v398 = vld [vmem:[#allocation5 + $0x348] sm:$0xff]
        %v399 = vld [vmem:[#allocation5 + $0x350] sm:$0xff]
        %v400 = vld [vmem:[#allocation5 + $0x358] sm:$0xff]
        %v401 = vld [vmem:[#allocation5 + $0x360] sm:$0xff]
        %v402 = vld [vmem:[#allocation5 + $0x368] sm:$0xff]
        %v403 = vld [vmem:[#allocation5 + $0x370] sm:$0xff]
        %v404 = vld [vmem:[#allocation5 + $0x378] sm:$0xff]
        %v405 = vld [vmem:[#allocation5 + $0x380] sm:$0xff]
        %v406 = vld [vmem:[#allocation5 + $0x388] sm:$0xff]
        %v407 = vld [vmem:[#allocation5 + $0x390] sm:$0xff]
        %v408 = vld [vmem:[#allocation5 + $0x398] sm:$0xff]
        %v409 = vld [vmem:[#allocation5 + $0x3a0] sm:$0xff]
        %v410 = vld [vmem:[#allocation5 + $0x3a8] sm:$0xff]
        %v411 = vld [vmem:[#allocation5 + $0x3b0] sm:$0xff]
        %v412 = vld [vmem:[#allocation5 + $0x3b8] sm:$0xff]
        %v413 = vld [vmem:[#allocation5 + $0x3c0] sm:$0xff]
        %v414 = vld [vmem:[#allocation5 + $0x3c8] sm:$0xff]
        %v415 = vld [vmem:[#allocation5 + $0x3d0] sm:$0xff]
        %v416 = vld [vmem:[#allocation5 + $0x3d8] sm:$0xff]
        %v417 = vld [vmem:[#allocation5 + $0x3e0] sm:$0xff]
        %v418 = vld [vmem:[#allocation5 + $0x3e8] sm:$0xff]
        %v419 = vld [vmem:[#allocation5 + $0x3f0] sm:$0xff]
        %v420 = vld [vmem:[#allocation5 + $0x3f8] sm:$0xff]
        %v549 = vunpack.c.l.b16 %v293
        %v550 = vunpack.c.h.b16 %v293
        %v551 = vunpack.c.l.b16 %v294
        %v552 = vunpack.c.h.b16 %v294
        %v553 = vunpack.c.l.b16 %v295
        %v554 = vunpack.c.h.b16 %v295
        %v555 = vunpack.c.l.b16 %v296
        %v556 = vunpack.c.h.b16 %v296
        %v557 = vunpack.c.l.b16 %v297
        %v558 = vunpack.c.h.b16 %v297
        %v559 = vunpack.c.l.b16 %v298
        %v560 = vunpack.c.h.b16 %v298
        %v561 = vunpack.c.l.b16 %v299
        %v562 = vunpack.c.h.b16 %v299
        %v563 = vunpack.c.l.b16 %v300
        %v564 = vunpack.c.h.b16 %v300
        %v565 = vunpack.c.l.b16 %v301
        %v566 = vunpack.c.h.b16 %v301
        %v567 = vunpack.c.l.b16 %v302
        %v568 = vunpack.c.h.b16 %v302
        %v569 = vunpack.c.l.b16 %v303
        %v570 = vunpack.c.h.b16 %v303
        %v571 = vunpack.c.l.b16 %v304
        %v572 = vunpack.c.h.b16 %v304
        %v573 = vunpack.c.l.b16 %v305
        %v574 = vunpack.c.h.b16 %v305
        %v575 = vunpack.c.l.b16 %v306
        %v576 = vunpack.c.h.b16 %v306
        %v577 = vunpack.c.l.b16 %v307
        %v578 = vunpack.c.h.b16 %v307
        %v579 = vunpack.c.l.b16 %v308
        %v580 = vunpack.c.h.b16 %v308
        %v581 = vunpack.c.l.b16 %v309
        %v582 = vunpack.c.h.b16 %v309
        %v583 = vunpack.c.l.b16 %v310
        %v584 = vunpack.c.h.b16 %v310
        %v585 = vunpack.c.l.b16 %v311
        %v586 = vunpack.c.h.b16 %v311
        %v587 = vunpack.c.l.b16 %v312
        %v588 = vunpack.c.h.b16 %v312
        %v589 = vunpack.c.l.b16 %v313
        %v590 = vunpack.c.h.b16 %v313
        %v591 = vunpack.c.l.b16 %v314
        %v592 = vunpack.c.h.b16 %v314
        %v593 = vunpack.c.l.b16 %v315
        %v594 = vunpack.c.h.b16 %v315
        %v595 = vunpack.c.l.b16 %v316
        %v596 = vunpack.c.h.b16 %v316
        %v597 = vunpack.c.l.b16 %v317
        %v598 = vunpack.c.h.b16 %v317
        %v599 = vunpack.c.l.b16 %v318
        %v600 = vunpack.c.h.b16 %v318
        %v601 = vunpack.c.l.b16 %v319
        %v602 = vunpack.c.h.b16 %v319
        %v603 = vunpack.c.l.b16 %v320
        %v604 = vunpack.c.h.b16 %v320
        %v605 = vunpack.c.l.b16 %v321
        %v606 = vunpack.c.h.b16 %v321
        %v607 = vunpack.c.l.b16 %v322
        %v608 = vunpack.c.h.b16 %v322
        %v609 = vunpack.c.l.b16 %v323
        %v610 = vunpack.c.h.b16 %v323
        %v611 = vunpack.c.l.b16 %v324
        %v612 = vunpack.c.h.b16 %v324
        %v613 = vunpack.c.l.b16 %v325
        %v614 = vunpack.c.h.b16 %v325
        %v615 = vunpack.c.l.b16 %v326
        %v616 = vunpack.c.h.b16 %v326
        %v617 = vunpack.c.l.b16 %v327
        %v618 = vunpack.c.h.b16 %v327
        %v619 = vunpack.c.l.b16 %v328
        %v620 = vunpack.c.h.b16 %v328
        %v621 = vunpack.c.l.b16 %v329
        %v622 = vunpack.c.h.b16 %v329
        %v623 = vunpack.c.l.b16 %v330
        %v624 = vunpack.c.h.b16 %v330
        %v625 = vunpack.c.l.b16 %v331
        %v626 = vunpack.c.h.b16 %v331
        %v627 = vunpack.c.l.b16 %v332
        %v628 = vunpack.c.h.b16 %v332
        %v629 = vunpack.c.l.b16 %v333
        %v630 = vunpack.c.h.b16 %v333
        %v631 = vunpack.c.l.b16 %v334
        %v632 = vunpack.c.h.b16 %v334
        %v633 = vunpack.c.l.b16 %v335
        %v634 = vunpack.c.h.b16 %v335
        %v635 = vunpack.c.l.b16 %v336
        %v636 = vunpack.c.h.b16 %v336
        %v637 = vunpack.c.l.b16 %v337
        %v638 = vunpack.c.h.b16 %v337
        %v639 = vunpack.c.l.b16 %v338
        %v640 = vunpack.c.h.b16 %v338
        %v641 = vunpack.c.l.b16 %v339
        %v642 = vunpack.c.h.b16 %v339
        %v643 = vunpack.c.l.b16 %v340
        %v644 = vunpack.c.h.b16 %v340
        %v645 = vunpack.c.l.b16 %v341
        %v646 = vunpack.c.h.b16 %v341
        %v647 = vunpack.c.l.b16 %v342
        %v648 = vunpack.c.h.b16 %v342
        %v649 = vunpack.c.l.b16 %v343
        %v650 = vunpack.c.h.b16 %v343
        %v651 = vunpack.c.l.b16 %v344
        %v652 = vunpack.c.h.b16 %v344
        %v653 = vunpack.c.l.b16 %v345
        %v654 = vunpack.c.h.b16 %v345
        %v655 = vunpack.c.l.b16 %v346
        %v656 = vunpack.c.h.b16 %v346
        %v657 = vunpack.c.l.b16 %v347
        %v658 = vunpack.c.h.b16 %v347
        %v659 = vunpack.c.l.b16 %v348
        %v660 = vunpack.c.h.b16 %v348
        %v661 = vunpack.c.l.b16 %v349
        %v662 = vunpack.c.h.b16 %v349
        %v663 = vunpack.c.l.b16 %v350
        %v664 = vunpack.c.h.b16 %v350
        %v665 = vunpack.c.l.b16 %v351
        %v666 = vunpack.c.h.b16 %v351
        %v667 = vunpack.c.l.b16 %v352
        %v668 = vunpack.c.h.b16 %v352
        %v669 = vunpack.c.l.b16 %v353
        %v670 = vunpack.c.h.b16 %v353
        %v671 = vunpack.c.l.b16 %v354
        %v672 = vunpack.c.h.b16 %v354
        %v673 = vunpack.c.l.b16 %v355
        %v674 = vunpack.c.h.b16 %v355
        %v675 = vunpack.c.l.b16 %v356
        %v676 = vunpack.c.h.b16 %v356
        %v677 = vunpack.c.l.b16 %v357
        %v678 = vunpack.c.h.b16 %v357
        %v679 = vunpack.c.l.b16 %v358
        %v680 = vunpack.c.h.b16 %v358
        %v681 = vunpack.c.l.b16 %v359
        %v682 = vunpack.c.h.b16 %v359
        %v683 = vunpack.c.l.b16 %v360
        %v684 = vunpack.c.h.b16 %v360
        %v685 = vunpack.c.l.b16 %v361
        %v686 = vunpack.c.h.b16 %v361
        %v687 = vunpack.c.l.b16 %v362
        %v688 = vunpack.c.h.b16 %v362
        %v689 = vunpack.c.l.b16 %v363
        %v690 = vunpack.c.h.b16 %v363
        %v691 = vunpack.c.l.b16 %v364
        %v692 = vunpack.c.h.b16 %v364
        %v693 = vunpack.c.l.b16 %v365
        %v694 = vunpack.c.h.b16 %v365
        %v695 = vunpack.c.l.b16 %v366
        %v696 = vunpack.c.h.b16 %v366
        %v697 = vunpack.c.l.b16 %v367
        %v698 = vunpack.c.h.b16 %v367
        %v699 = vunpack.c.l.b16 %v368
        %v700 = vunpack.c.h.b16 %v368
        %v701 = vunpack.c.l.b16 %v369
        %v702 = vunpack.c.h.b16 %v369
        %v703 = vunpack.c.l.b16 %v370
        %v704 = vunpack.c.h.b16 %v370
        %v705 = vunpack.c.l.b16 %v371
        %v706 = vunpack.c.h.b16 %v371
        %v707 = vunpack.c.l.b16 %v372
        %v708 = vunpack.c.h.b16 %v372
        %v709 = vunpack.c.l.b16 %v373
        %v710 = vunpack.c.h.b16 %v373
        %v711 = vunpack.c.l.b16 %v374
        %v712 = vunpack.c.h.b16 %v374
        %v713 = vunpack.c.l.b16 %v375
        %v714 = vunpack.c.h.b16 %v375
        %v715 = vunpack.c.l.b16 %v376
        %v716 = vunpack.c.h.b16 %v376
        %v717 = vunpack.c.l.b16 %v377
        %v718 = vunpack.c.h.b16 %v377
        %v719 = vunpack.c.l.b16 %v378
        %v720 = vunpack.c.h.b16 %v378
        %v721 = vunpack.c.l.b16 %v379
        %v722 = vunpack.c.h.b16 %v379
        %v723 = vunpack.c.l.b16 %v380
        %v724 = vunpack.c.h.b16 %v380
        %v725 = vunpack.c.l.b16 %v381
        %v726 = vunpack.c.h.b16 %v381
        %v727 = vunpack.c.l.b16 %v382
        %v728 = vunpack.c.h.b16 %v382
        %v729 = vunpack.c.l.b16 %v383
        %v730 = vunpack.c.h.b16 %v383
        %v731 = vunpack.c.l.b16 %v384
        %v732 = vunpack.c.h.b16 %v384
        %v733 = vunpack.c.l.b16 %v385
        %v734 = vunpack.c.h.b16 %v385
        %v735 = vunpack.c.l.b16 %v386
        %v736 = vunpack.c.h.b16 %v386
        %v737 = vunpack.c.l.b16 %v387
        %v738 = vunpack.c.h.b16 %v387
        %v739 = vunpack.c.l.b16 %v388
        %v740 = vunpack.c.h.b16 %v388
        %v741 = vunpack.c.l.b16 %v389
        %v742 = vunpack.c.h.b16 %v389
        %v743 = vunpack.c.l.b16 %v390
        %v744 = vunpack.c.h.b16 %v390
        %v745 = vunpack.c.l.b16 %v391
        %v746 = vunpack.c.h.b16 %v391
        %v747 = vunpack.c.l.b16 %v392
        %v748 = vunpack.c.h.b16 %v392
        %v749 = vunpack.c.l.b16 %v393
        %v750 = vunpack.c.h.b16 %v393
        %v751 = vunpack.c.l.b16 %v394
        %v752 = vunpack.c.h.b16 %v394
        %v753 = vunpack.c.l.b16 %v395
        %v754 = vunpack.c.h.b16 %v395
        %v755 = vunpack.c.l.b16 %v396
        %v756 = vunpack.c.h.b16 %v396
        %v757 = vunpack.c.l.b16 %v397
        %v758 = vunpack.c.h.b16 %v397
        %v759 = vunpack.c.l.b16 %v398
        %v760 = vunpack.c.h.b16 %v398
        %v761 = vunpack.c.l.b16 %v399
        %v762 = vunpack.c.h.b16 %v399
        %v763 = vunpack.c.l.b16 %v400
        %v764 = vunpack.c.h.b16 %v400
        %v765 = vunpack.c.l.b16 %v401
        %v766 = vunpack.c.h.b16 %v401
        %v767 = vunpack.c.l.b16 %v402
        %v768 = vunpack.c.h.b16 %v402
        %v769 = vunpack.c.l.b16 %v403
        %v770 = vunpack.c.h.b16 %v403
        %v771 = vunpack.c.l.b16 %v404
        %v772 = vunpack.c.h.b16 %v404
        %v773 = vunpack.c.l.b16 %v405
        %v774 = vunpack.c.h.b16 %v405
        %v775 = vunpack.c.l.b16 %v406
        %v776 = vunpack.c.h.b16 %v406
        %v777 = vunpack.c.l.b16 %v407
        %v778 = vunpack.c.h.b16 %v407
        %v779 = vunpack.c.l.b16 %v408
        %v780 = vunpack.c.h.b16 %v408
        %v781 = vunpack.c.l.b16 %v409
        %v782 = vunpack.c.h.b16 %v409
        %v783 = vunpack.c.l.b16 %v410
        %v784 = vunpack.c.h.b16 %v410
        %v785 = vunpack.c.l.b16 %v411
        %v786 = vunpack.c.h.b16 %v411
        %v787 = vunpack.c.l.b16 %v412
        %v788 = vunpack.c.h.b16 %v412
        %v789 = vunpack.c.l.b16 %v413
        %v790 = vunpack.c.h.b16 %v413
        %v791 = vunpack.c.l.b16 %v414
        %v792 = vunpack.c.h.b16 %v414
        %v793 = vunpack.c.l.b16 %v415
        %v794 = vunpack.c.h.b16 %v415
        %v795 = vunpack.c.l.b16 %v416
        %v796 = vunpack.c.h.b16 %v416
        %v797 = vunpack.c.l.b16 %v417
        %v798 = vunpack.c.h.b16 %v417
        %v799 = vunpack.c.l.b16 %v418
        %v800 = vunpack.c.h.b16 %v418
        %v801 = vunpack.c.l.b16 %v419
        %v802 = vunpack.c.h.b16 %v419
        %v803 = vunpack.c.l.b16 %v420
        %v804 = vunpack.c.h.b16 %v420
        %v805 = vpack.c.b16 %v553, %v549
        %v806 = vpack.c.b16 %v554, %v550
        %v807 = vpack.c.b16 %v555, %v551
        %v808 = vpack.c.b16 %v556, %v552
        %v809 = vpack.c.b16 %v561, %v557
        %v810 = vpack.c.b16 %v562, %v558
        %v811 = vpack.c.b16 %v563, %v559
        %v812 = vpack.c.b16 %v564, %v560
        %v813 = vpack.c.b16 %v569, %v565
        %v814 = vpack.c.b16 %v570, %v566
        %v815 = vpack.c.b16 %v571, %v567
        %v816 = vpack.c.b16 %v572, %v568
        %v817 = vpack.c.b16 %v577, %v573
        %v818 = vpack.c.b16 %v578, %v574
        %v819 = vpack.c.b16 %v579, %v575
        %v820 = vpack.c.b16 %v580, %v576
        %v821 = vpack.c.b16 %v585, %v581
        %v822 = vpack.c.b16 %v586, %v582
        %v823 = vpack.c.b16 %v587, %v583
        %v824 = vpack.c.b16 %v588, %v584
        %v825 = vpack.c.b16 %v593, %v589
        %v826 = vpack.c.b16 %v594, %v590
        %v827 = vpack.c.b16 %v595, %v591
        %v828 = vpack.c.b16 %v596, %v592
        %v829 = vpack.c.b16 %v601, %v597
        %v830 = vpack.c.b16 %v602, %v598
        %v831 = vpack.c.b16 %v603, %v599
        %v832 = vpack.c.b16 %v604, %v600
        %v833 = vpack.c.b16 %v609, %v605
        %v834 = vpack.c.b16 %v610, %v606
        %v835 = vpack.c.b16 %v611, %v607
        %v836 = vpack.c.b16 %v612, %v608
        %v837 = vpack.c.b16 %v617, %v613
        %v838 = vpack.c.b16 %v618, %v614
        %v839 = vpack.c.b16 %v619, %v615
        %v840 = vpack.c.b16 %v620, %v616
        %v841 = vpack.c.b16 %v625, %v621
        %v842 = vpack.c.b16 %v626, %v622
        %v843 = vpack.c.b16 %v627, %v623
        %v844 = vpack.c.b16 %v628, %v624
        %v845 = vpack.c.b16 %v633, %v629
        %v846 = vpack.c.b16 %v634, %v630
        %v847 = vpack.c.b16 %v635, %v631
        %v848 = vpack.c.b16 %v636, %v632
        %v849 = vpack.c.b16 %v641, %v637
        %v850 = vpack.c.b16 %v642, %v638
        %v851 = vpack.c.b16 %v643, %v639
        %v852 = vpack.c.b16 %v644, %v640
        %v853 = vpack.c.b16 %v649, %v645
        %v854 = vpack.c.b16 %v650, %v646
        %v855 = vpack.c.b16 %v651, %v647
        %v856 = vpack.c.b16 %v652, %v648
        %v857 = vpack.c.b16 %v657, %v653
        %v858 = vpack.c.b16 %v658, %v654
        %v859 = vpack.c.b16 %v659, %v655
        %v860 = vpack.c.b16 %v660, %v656
        %v861 = vpack.c.b16 %v665, %v661
        %v862 = vpack.c.b16 %v666, %v662
        %v863 = vpack.c.b16 %v667, %v663
        %v864 = vpack.c.b16 %v668, %v664
        %v865 = vpack.c.b16 %v673, %v669
        %v866 = vpack.c.b16 %v674, %v670
        %v867 = vpack.c.b16 %v675, %v671
        %v868 = vpack.c.b16 %v676, %v672
        %v869 = vpack.c.b16 %v681, %v677
        %v870 = vpack.c.b16 %v682, %v678
        %v871 = vpack.c.b16 %v683, %v679
        %v872 = vpack.c.b16 %v684, %v680
        %v873 = vpack.c.b16 %v689, %v685
        %v874 = vpack.c.b16 %v690, %v686
        %v875 = vpack.c.b16 %v691, %v687
        %v876 = vpack.c.b16 %v692, %v688
        %v877 = vpack.c.b16 %v697, %v693
        %v878 = vpack.c.b16 %v698, %v694
        %v879 = vpack.c.b16 %v699, %v695
        %v880 = vpack.c.b16 %v700, %v696
        %v881 = vpack.c.b16 %v705, %v701
        %v882 = vpack.c.b16 %v706, %v702
        %v883 = vpack.c.b16 %v707, %v703
        %v884 = vpack.c.b16 %v708, %v704
        %v885 = vpack.c.b16 %v713, %v709
        %v886 = vpack.c.b16 %v714, %v710
        %v887 = vpack.c.b16 %v715, %v711
        %v888 = vpack.c.b16 %v716, %v712
        %v889 = vpack.c.b16 %v721, %v717
        %v890 = vpack.c.b16 %v722, %v718
        %v891 = vpack.c.b16 %v723, %v719
        %v892 = vpack.c.b16 %v724, %v720
        %v893 = vpack.c.b16 %v729, %v725
        %v894 = vpack.c.b16 %v730, %v726
        %v895 = vpack.c.b16 %v731, %v727
        %v896 = vpack.c.b16 %v732, %v728
        %v897 = vpack.c.b16 %v737, %v733
        %v898 = vpack.c.b16 %v738, %v734
        %v899 = vpack.c.b16 %v739, %v735
        %v900 = vpack.c.b16 %v740, %v736
        %v901 = vpack.c.b16 %v745, %v741
        %v902 = vpack.c.b16 %v746, %v742
        %v903 = vpack.c.b16 %v747, %v743
        %v904 = vpack.c.b16 %v748, %v744
        %v905 = vpack.c.b16 %v753, %v749
        %v906 = vpack.c.b16 %v754, %v750
        %v907 = vpack.c.b16 %v755, %v751
        %v908 = vpack.c.b16 %v756, %v752
        %v909 = vpack.c.b16 %v761, %v757
        %v910 = vpack.c.b16 %v762, %v758
        %v911 = vpack.c.b16 %v763, %v759
        %v912 = vpack.c.b16 %v764, %v760
        %v913 = vpack.c.b16 %v769, %v765
        %v914 = vpack.c.b16 %v770, %v766
        %v915 = vpack.c.b16 %v771, %v767
        %v916 = vpack.c.b16 %v772, %v768
        %v917 = vpack.c.b16 %v777, %v773
        %v918 = vpack.c.b16 %v778, %v774
        %v919 = vpack.c.b16 %v779, %v775
        %v920 = vpack.c.b16 %v780, %v776
        %v921 = vpack.c.b16 %v785, %v781
        %v922 = vpack.c.b16 %v786, %v782
        %v923 = vpack.c.b16 %v787, %v783
        %v924 = vpack.c.b16 %v788, %v784
        %v925 = vpack.c.b16 %v793, %v789
        %v926 = vpack.c.b16 %v794, %v790
        %v927 = vpack.c.b16 %v795, %v791
        %v928 = vpack.c.b16 %v796, %v792
        %v929 = vpack.c.b16 %v801, %v797
        %v930 = vpack.c.b16 %v802, %v798
        %v931 = vpack.c.b16 %v803, %v799
        %v932 = vpack.c.b16 %v804, %v800
        %1061 = vmatprep.subr.bf16.mxu0 %v806
        %1062 = vmatpush1.bf16.msra.mxu0 %v805
        %1063 = vmatprep.subr.bf16.mxu0 %v810
        %1064 = vmatpush1.bf16.msra.mxu0 %v809
        %1065 = vmatprep.subr.bf16.mxu0 %v814
        %1066 = vmatpush1.bf16.msra.mxu0 %v813
        %1067 = vmatprep.subr.bf16.mxu0 %v818
        %1068 = vmatpush1.bf16.msra.mxu0 %v817
        %1069 = vmatprep.subr.bf16.mxu0 %v822
        %1070 = vmatpush1.bf16.msra.mxu0 %v821
        %1071 = vmatprep.subr.bf16.mxu0 %v826
        %1072 = vmatpush1.bf16.msra.mxu0 %v825
        %1073 = vmatprep.subr.bf16.mxu0 %v830
        %1074 = vmatpush1.bf16.msra.mxu0 %v829
        %1075 = vmatprep.subr.bf16.mxu0 %v834
        %1076 = vmatpush1.bf16.msra.mxu0 %v833
        %1077 = vmatprep.subr.bf16.mxu0 %v838
        %1078 = vmatpush1.bf16.msra.mxu0 %v837
        %1079 = vmatprep.subr.bf16.mxu0 %v842
        %1080 = vmatpush1.bf16.msra.mxu0 %v841
        %1081 = vmatprep.subr.bf16.mxu0 %v846
        %1082 = vmatpush1.bf16.msra.mxu0 %v845
        %1083 = vmatprep.subr.bf16.mxu0 %v850
        %1084 = vmatpush1.bf16.msra.mxu0 %v849
        %1085 = vmatprep.subr.bf16.mxu0 %v854
        %1086 = vmatpush1.bf16.msra.mxu0 %v853
        %1087 = vmatprep.subr.bf16.mxu0 %v858
        %1088 = vmatpush1.bf16.msra.mxu0 %v857
        %1089 = vmatprep.subr.bf16.mxu0 %v862
        %1090 = vmatpush1.bf16.msra.mxu0 %v861
        %1091 = vmatprep.subr.bf16.mxu0 %v866
        %1092 = vmatpush1.bf16.msra.mxu0 %v865
        %1093 = vmatprep.mubr.bf16.mxu0 %v290
        %1094 = vmatmul.mubr.bf16.gmra.mrb[0].mxu0 %v289
        %v1095 = vpop.f32.mrb[0].mxu0
        %v1096 = vadd.f32 0.0, %v1095
        %v1097 = vpop.f32.mrb[0].mxu0
        %v1098 = vadd.f32 0.0, %v1097
        %v1099 = vpop.f32.mrb[0].mxu0
        %v1100 = vpop.f32.mrb[0].mxu0
        %1101 = vdwg.mxu0
        %1102 = vmatprep.subr.bf16.mxu0 %v870
        %1103 = vmatpush1.bf16.msra.mxu0 %v869
        %1104 = vmatprep.subr.bf16.mxu0 %v874
        %1105 = vmatpush1.bf16.msra.mxu0 %v873
        %1106 = vmatprep.subr.bf16.mxu0 %v878
        %1107 = vmatpush1.bf16.msra.mxu0 %v877
        %1108 = vmatprep.subr.bf16.mxu0 %v882
        %1109 = vmatpush1.bf16.msra.mxu0 %v881
        %1110 = vmatprep.subr.bf16.mxu0 %v886
        %1111 = vmatpush1.bf16.msra.mxu0 %v885
        %1112 = vmatprep.subr.bf16.mxu0 %v890
        %1113 = vmatpush1.bf16.msra.mxu0 %v889
        %1114 = vmatprep.subr.bf16.mxu0 %v894
        %1115 = vmatpush1.bf16.msra.mxu0 %v893
        %1116 = vmatprep.subr.bf16.mxu0 %v898
        %1117 = vmatpush1.bf16.msra.mxu0 %v897
        %1118 = vmatprep.subr.bf16.mxu0 %v902
        %1119 = vmatpush1.bf16.msra.mxu0 %v901
        %1120 = vmatprep.subr.bf16.mxu0 %v906
        %1121 = vmatpush1.bf16.msra.mxu0 %v905
        %1122 = vmatprep.subr.bf16.mxu0 %v910
        %1123 = vmatpush1.bf16.msra.mxu0 %v909
        %1124 = vmatprep.subr.bf16.mxu0 %v914
        %1125 = vmatpush1.bf16.msra.mxu0 %v913
        %1126 = vmatprep.subr.bf16.mxu0 %v918
        %1127 = vmatpush1.bf16.msra.mxu0 %v917
        %1128 = vmatprep.subr.bf16.mxu0 %v922
        %1129 = vmatpush1.bf16.msra.mxu0 %v921
        %1130 = vmatprep.subr.bf16.mxu0 %v926
        %1131 = vmatpush1.bf16.msra.mxu0 %v925
        %1132 = vmatprep.subr.bf16.mxu0 %v930
        %1133 = vmatpush1.bf16.msra.mxu0 %v929
        %1134 = vmatprep.mubr.bf16.mxu0 %v292
        %1135 = vmatmul.mubr.bf16.gmra.mrb[0].mxu0 %v291
        %v1136 = vpop.f32.mrb[0].mxu0
        %v1137 = vadd.f32 %v1096, %v1136
        %v1138 = vpop.f32.mrb[0].mxu0
        %v1139 = vadd.f32 %v1098, %v1138
        %v1140 = vpop.f32.mrb[0].mxu0
        %v1141 = vpop.f32.mrb[0].mxu0
        %1142 = vdwg.mxu0
        %1143 = vmatprep.subr.bf16.mxu0 %v808
        %1144 = vmatpush1.bf16.msra.mxu0 %v807
        %1145 = vmatprep.subr.bf16.mxu0 %v812
        %1146 = vmatpush1.bf16.msra.mxu0 %v811
        %1147 = vmatprep.subr.bf16.mxu0 %v816
        %1148 = vmatpush1.bf16.msra.mxu0 %v815
        %1149 = vmatprep.subr.bf16.mxu0 %v820
        %1150 = vmatpush1.bf16.msra.mxu0 %v819
        %1151 = vmatprep.subr.bf16.mxu0 %v824
        %1152 = vmatpush1.bf16.msra.mxu0 %v823
        %1153 = vmatprep.subr.bf16.mxu0 %v828
        %1154 = vmatpush1.bf16.msra.mxu0 %v827
        %1155 = vmatprep.subr.bf16.mxu0 %v832
        %1156 = vmatpush1.bf16.msra.mxu0 %v831
        %1157 = vmatprep.subr.bf16.mxu0 %v836
        %1158 = vmatpush1.bf16.msra.mxu0 %v835
        %1159 = vmatprep.subr.bf16.mxu0 %v840
        %1160 = vmatpush1.bf16.msra.mxu0 %v839
        %1161 = vmatprep.subr.bf16.mxu0 %v844
        %1162 = vmatpush1.bf16.msra.mxu0 %v843
        %1163 = vmatprep.subr.bf16.mxu0 %v848
        %1164 = vmatpush1.bf16.msra.mxu0 %v847
        %1165 = vmatprep.subr.bf16.mxu0 %v852
        %1166 = vmatpush1.bf16.msra.mxu0 %v851
        %1167 = vmatprep.subr.bf16.mxu0 %v856
        %1168 = vmatpush1.bf16.msra.mxu0 %v855
        %1169 = vmatprep.subr.bf16.mxu0 %v860
        %1170 = vmatpush1.bf16.msra.mxu0 %v859
        %1171 = vmatprep.subr.bf16.mxu0 %v864
        %1172 = vmatpush1.bf16.msra.mxu0 %v863
        %1173 = vmatprep.subr.bf16.mxu0 %v868
        %1174 = vmatpush1.bf16.msra.mxu0 %v867
        %1175 = vmatprep.mubr.bf16.mxu0 %v290
        %1176 = vmatmul.mubr.bf16.gmra.mrb[0].mxu0 %v289
        %v1177 = vpop.f32.mrb[0].mxu0
        %v1178 = vadd.f32 0.0, %v1177
        %v1179 = vpop.f32.mrb[0].mxu0
        %v1180 = vadd.f32 0.0, %v1179
        %v1181 = vpop.f32.mrb[0].mxu0
        %v1182 = vpop.f32.mrb[0].mxu0
        %1183 = vdwg.mxu0
        %1184 = vmatprep.subr.bf16.mxu0 %v872
        %1185 = vmatpush1.bf16.msra.mxu0 %v871
        %1186 = vmatprep.subr.bf16.mxu0 %v876
        %1187 = vmatpush1.bf16.msra.mxu0 %v875
        %1188 = vmatprep.subr.bf16.mxu0 %v880
        %1189 = vmatpush1.bf16.msra.mxu0 %v879
        %1190 = vmatprep.subr.bf16.mxu0 %v884
        %1191 = vmatpush1.bf16.msra.mxu0 %v883
        %1192 = vmatprep.subr.bf16.mxu0 %v888
        %1193 = vmatpush1.bf16.msra.mxu0 %v887
        %1194 = vmatprep.subr.bf16.mxu0 %v892
        %1195 = vmatpush1.bf16.msra.mxu0 %v891
        %1196 = vmatprep.subr.bf16.mxu0 %v896
        %1197 = vmatpush1.bf16.msra.mxu0 %v895
        %1198 = vmatprep.subr.bf16.mxu0 %v900
        %1199 = vmatpush1.bf16.msra.mxu0 %v899
        %1200 = vmatprep.subr.bf16.mxu0 %v904
        %1201 = vmatpush1.bf16.msra.mxu0 %v903
        %1202 = vmatprep.subr.bf16.mxu0 %v908
        %1203 = vmatpush1.bf16.msra.mxu0 %v907
        %1204 = vmatprep.subr.bf16.mxu0 %v912
        %1205 = vmatpush1.bf16.msra.mxu0 %v911
        %1206 = vmatprep.subr.bf16.mxu0 %v916
        %1207 = vmatpush1.bf16.msra.mxu0 %v915
        %1208 = vmatprep.subr.bf16.mxu0 %v920
        %1209 = vmatpush1.bf16.msra.mxu0 %v919
        %1210 = vmatprep.subr.bf16.mxu0 %v924
        %1211 = vmatpush1.bf16.msra.mxu0 %v923
        %1212 = vmatprep.subr.bf16.mxu0 %v928
        %1213 = vmatpush1.bf16.msra.mxu0 %v927
        %1214 = vmatprep.subr.bf16.mxu0 %v932
        %1215 = vmatpush1.bf16.msra.mxu0 %v931
        %1216 = vmatprep.mubr.bf16.mxu0 %v292
        %1217 = vmatmul.mubr.bf16.gmra.mrb[0].mxu0 %v291
        %v1218 = vpop.f32.mrb[0].mxu0
        %v1219 = vadd.f32 %v1178, %v1218
        %v1220 = vpop.f32.mrb[0].mxu0
        %v1221 = vadd.f32 %v1180, %v1220
        %v1222 = vpop.f32.mrb[0].mxu0
        %v1223 = vpop.f32.mrb[0].mxu0
        %1224 = vdwg.mxu0
        %v1225 = vld [vmem:[#allocation7] ss:$2 sm:$0xf]
        %v1227 = vlaneseq
        %v1228 = vshrl.u32 %v1227, 7
        %v1229 = vsub.s32 0, %v1228
        %v1230 = vrot.slane %v1225, %v1229
        %v1231 = vlaneseq
        %v1232 = vshrl.u32 %v1231, 7
        %v1233 = vsub.s32 1, %v1232
        %v1234 = vrot.slane %v1225, %v1233
        %v1235 = vlaneseq
        %v1236 = vshrl.u32 %v1235, 7
        %v1237 = vsub.s32 2, %v1236
        %v1238 = vrot.slane %v1225, %v1237
        %v1239 = vlaneseq
        %v1240 = vshrl.u32 %v1239, 7
        %v1241 = vsub.s32 3, %v1240
        %v1242 = vrot.slane %v1225, %v1241
        %v1247 = vmul.f32 %v1137, %v1230
        %v1248 = vmul.f32 %v1139, %v1234
        %v1249 = vmul.f32 %v1219, %v1238
        %v1250 = vmul.f32 %v1221, %v1242
        %s1251 = scalar_lea.vmem [#allocation7], 1
        %v1252 = vld [vmem:[%s1251] ss:$2 sm:$0xf]
        %v1254 = vlaneseq
        %v1255 = vshrl.u32 %v1254, 7
        %v1256 = vsub.s32 0, %v1255
        %v1257 = vrot.slane %v1252, %v1256
        %v1258 = vlaneseq
        %v1259 = vshrl.u32 %v1258, 7
        %v1260 = vsub.s32 1, %v1259
        %v1261 = vrot.slane %v1252, %v1260
        %v1262 = vlaneseq
        %v1263 = vshrl.u32 %v1262, 7
        %v1264 = vsub.s32 2, %v1263
        %v1265 = vrot.slane %v1252, %v1264
        %v1266 = vlaneseq
        %v1267 = vshrl.u32 %v1266, 7
        %v1268 = vsub.s32 3, %v1267
        %v1269 = vrot.slane %v1252, %v1268
        %v1274 = vadd.f32 %v1247, %v1257
        %v1275 = vadd.f32 %v1248, %v1261
        %v1276 = vadd.f32 %v1249, %v1265
        %v1277 = vadd.f32 %v1250, %v1269
        %v1278 = vmax.f32 %v1274, 0.0
        %v1279 = vmax.f32 %v1275, 0.0
        %v1280 = vmax.f32 %v1276, 0.0
        %v1281 = vmax.f32 %v1277, 0.0
        %v1282 = vpack.c.bf16 %v1278, %v1278
        %v1283 = vpack.c.bf16 %v1279, %v1279
        %v1284 = vpack.c.bf16 %v1280, %v1280
        %v1285 = vpack.c.bf16 %v1281, %v1281
        %s1286 = scalar_lea.vmem [#allocation5], 1024
        %v1287 = vld [vmem:[%s1286] sm:$0xff]
        %v1288 = vld [vmem:[%s1286 + $0x8] sm:$0xff]
        %v1289 = vld [vmem:[%s1286 + $0x10] sm:$0xff]
        %v1290 = vld [vmem:[%s1286 + $0x18] sm:$0xff]
        %v1291 = vld [vmem:[%s1286 + $0x20] sm:$0xff]
        %v1292 = vld [vmem:[%s1286 + $0x28] sm:$0xff]
        %v1293 = vld [vmem:[%s1286 + $0x30] sm:$0xff]
        %v1294 = vld [vmem:[%s1286 + $0x38] sm:$0xff]
        %v1295 = vld [vmem:[%s1286 + $0x40] sm:$0xff]
        %v1296 = vld [vmem:[%s1286 + $0x48] sm:$0xff]
        %v1297 = vld [vmem:[%s1286 + $0x50] sm:$0xff]
        %v1298 = vld [vmem:[%s1286 + $0x58] sm:$0xff]
        %v1299 = vld [vmem:[%s1286 + $0x60] sm:$0xff]
        %v1300 = vld [vmem:[%s1286 + $0x68] sm:$0xff]
        %v1301 = vld [vmem:[%s1286 + $0x70] sm:$0xff]
        %v1302 = vld [vmem:[%s1286 + $0x78] sm:$0xff]
        %v1303 = vld [vmem:[%s1286 + $0x80] sm:$0xff]
        %v1304 = vld [vmem:[%s1286 + $0x88] sm:$0xff]
        %v1305 = vld [vmem:[%s1286 + $0x90] sm:$0xff]
        %v1306 = vld [vmem:[%s1286 + $0x98] sm:$0xff]
        %v1307 = vld [vmem:[%s1286 + $0xa0] sm:$0xff]
        %v1308 = vld [vmem:[%s1286 + $0xa8] sm:$0xff]
        %v1309 = vld [vmem:[%s1286 + $0xb0] sm:$0xff]
        %v1310 = vld [vmem:[%s1286 + $0xb8] sm:$0xff]
        %v1311 = vld [vmem:[%s1286 + $0xc0] sm:$0xff]
        %v1312 = vld [vmem:[%s1286 + $0xc8] sm:$0xff]
        %v1313 = vld [vmem:[%s1286 + $0xd0] sm:$0xff]
        %v1314 = vld [vmem:[%s1286 + $0xd8] sm:$0xff]
        %v1315 = vld [vmem:[%s1286 + $0xe0] sm:$0xff]
        %v1316 = vld [vmem:[%s1286 + $0xe8] sm:$0xff]
        %v1317 = vld [vmem:[%s1286 + $0xf0] sm:$0xff]
        %v1318 = vld [vmem:[%s1286 + $0xf8] sm:$0xff]
        %v1319 = vld [vmem:[%s1286 + $0x100] sm:$0xff]
        %v1320 = vld [vmem:[%s1286 + $0x108] sm:$0xff]
        %v1321 = vld [vmem:[%s1286 + $0x110] sm:$0xff]
        %v1322 = vld [vmem:[%s1286 + $0x118] sm:$0xff]
        %v1323 = vld [vmem:[%s1286 + $0x120] sm:$0xff]
        %v1324 = vld [vmem:[%s1286 + $0x128] sm:$0xff]
        %v1325 = vld [vmem:[%s1286 + $0x130] sm:$0xff]
        %v1326 = vld [vmem:[%s1286 + $0x138] sm:$0xff]
        %v1327 = vld [vmem:[%s1286 + $0x140] sm:$0xff]
        %v1328 = vld [vmem:[%s1286 + $0x148] sm:$0xff]
        %v1329 = vld [vmem:[%s1286 + $0x150] sm:$0xff]
        %v1330 = vld [vmem:[%s1286 + $0x158] sm:$0xff]
        %v1331 = vld [vmem:[%s1286 + $0x160] sm:$0xff]
        %v1332 = vld [vmem:[%s1286 + $0x168] sm:$0xff]
        %v1333 = vld [vmem:[%s1286 + $0x170] sm:$0xff]
        %v1334 = vld [vmem:[%s1286 + $0x178] sm:$0xff]
        %v1335 = vld [vmem:[%s1286 + $0x180] sm:$0xff]
        %v1336 = vld [vmem:[%s1286 + $0x188] sm:$0xff]
        %v1337 = vld [vmem:[%s1286 + $0x190] sm:$0xff]
        %v1338 = vld [vmem:[%s1286 + $0x198] sm:$0xff]
        %v1339 = vld [vmem:[%s1286 + $0x1a0] sm:$0xff]
        %v1340 = vld [vmem:[%s1286 + $0x1a8] sm:$0xff]
        %v1341 = vld [vmem:[%s1286 + $0x1b0] sm:$0xff]
        %v1342 = vld [vmem:[%s1286 + $0x1b8] sm:$0xff]
        %v1343 = vld [vmem:[%s1286 + $0x1c0] sm:$0xff]
        %v1344 = vld [vmem:[%s1286 + $0x1c8] sm:$0xff]
        %v1345 = vld [vmem:[%s1286 + $0x1d0] sm:$0xff]
        %v1346 = vld [vmem:[%s1286 + $0x1d8] sm:$0xff]
        %v1347 = vld [vmem:[%s1286 + $0x1e0] sm:$0xff]
        %v1348 = vld [vmem:[%s1286 + $0x1e8] sm:$0xff]
        %v1349 = vld [vmem:[%s1286 + $0x1f0] sm:$0xff]
        %v1350 = vld [vmem:[%s1286 + $0x1f8] sm:$0xff]
        %v1351 = vld [vmem:[%s1286 + $0x200] sm:$0xff]
        %v1352 = vld [vmem:[%s1286 + $0x208] sm:$0xff]
        %v1353 = vld [vmem:[%s1286 + $0x210] sm:$0xff]
        %v1354 = vld [vmem:[%s1286 + $0x218] sm:$0xff]
        %v1355 = vld [vmem:[%s1286 + $0x220] sm:$0xff]
        %v1356 = vld [vmem:[%s1286 + $0x228] sm:$0xff]
        %v1357 = vld [vmem:[%s1286 + $0x230] sm:$0xff]
        %v1358 = vld [vmem:[%s1286 + $0x238] sm:$0xff]
        %v1359 = vld [vmem:[%s1286 + $0x240] sm:$0xff]
        %v1360 = vld [vmem:[%s1286 + $0x248] sm:$0xff]
        %v1361 = vld [vmem:[%s1286 + $0x250] sm:$0xff]
        %v1362 = vld [vmem:[%s1286 + $0x258] sm:$0xff]
        %v1363 = vld [vmem:[%s1286 + $0x260] sm:$0xff]
        %v1364 = vld [vmem:[%s1286 + $0x268] sm:$0xff]
        %v1365 = vld [vmem:[%s1286 + $0x270] sm:$0xff]
        %v1366 = vld [vmem:[%s1286 + $0x278] sm:$0xff]
        %v1367 = vld [vmem:[%s1286 + $0x280] sm:$0xff]
        %v1368 = vld [vmem:[%s1286 + $0x288] sm:$0xff]
        %v1369 = vld [vmem:[%s1286 + $0x290] sm:$0xff]
        %v1370 = vld [vmem:[%s1286 + $0x298] sm:$0xff]
        %v1371 = vld [vmem:[%s1286 + $0x2a0] sm:$0xff]
        %v1372 = vld [vmem:[%s1286 + $0x2a8] sm:$0xff]
        %v1373 = vld [vmem:[%s1286 + $0x2b0] sm:$0xff]
        %v1374 = vld [vmem:[%s1286 + $0x2b8] sm:$0xff]
        %v1375 = vld [vmem:[%s1286 + $0x2c0] sm:$0xff]
        %v1376 = vld [vmem:[%s1286 + $0x2c8] sm:$0xff]
        %v1377 = vld [vmem:[%s1286 + $0x2d0] sm:$0xff]
        %v1378 = vld [vmem:[%s1286 + $0x2d8] sm:$0xff]
        %v1379 = vld [vmem:[%s1286 + $0x2e0] sm:$0xff]
        %v1380 = vld [vmem:[%s1286 + $0x2e8] sm:$0xff]
        %v1381 = vld [vmem:[%s1286 + $0x2f0] sm:$0xff]
        %v1382 = vld [vmem:[%s1286 + $0x2f8] sm:$0xff]
        %v1383 = vld [vmem:[%s1286 + $0x300] sm:$0xff]
        %v1384 = vld [vmem:[%s1286 + $0x308] sm:$0xff]
        %v1385 = vld [vmem:[%s1286 + $0x310] sm:$0xff]
        %v1386 = vld [vmem:[%s1286 + $0x318] sm:$0xff]
        %v1387 = vld [vmem:[%s1286 + $0x320] sm:$0xff]
        %v1388 = vld [vmem:[%s1286 + $0x328] sm:$0xff]
        %v1389 = vld [vmem:[%s1286 + $0x330] sm:$0xff]
        %v1390 = vld [vmem:[%s1286 + $0x338] sm:$0xff]
        %v1391 = vld [vmem:[%s1286 + $0x340] sm:$0xff]
        %v1392 = vld [vmem:[%s1286 + $0x348] sm:$0xff]
        %v1393 = vld [vmem:[%s1286 + $0x350] sm:$0xff]
        %v1394 = vld [vmem:[%s1286 + $0x358] sm:$0xff]
        %v1395 = vld [vmem:[%s1286 + $0x360] sm:$0xff]
        %v1396 = vld [vmem:[%s1286 + $0x368] sm:$0xff]
        %v1397 = vld [vmem:[%s1286 + $0x370] sm:$0xff]
        %v1398 = vld [vmem:[%s1286 + $0x378] sm:$0xff]
        %v1399 = vld [vmem:[%s1286 + $0x380] sm:$0xff]
        %v1400 = vld [vmem:[%s1286 + $0x388] sm:$0xff]
        %v1401 = vld [vmem:[%s1286 + $0x390] sm:$0xff]
        %v1402 = vld [vmem:[%s1286 + $0x398] sm:$0xff]
        %v1403 = vld [vmem:[%s1286 + $0x3a0] sm:$0xff]
        %v1404 = vld [vmem:[%s1286 + $0x3a8] sm:$0xff]
        %v1405 = vld [vmem:[%s1286 + $0x3b0] sm:$0xff]
        %v1406 = vld [vmem:[%s1286 + $0x3b8] sm:$0xff]
        %v1407 = vld [vmem:[%s1286 + $0x3c0] sm:$0xff]
        %v1408 = vld [vmem:[%s1286 + $0x3c8] sm:$0xff]
        %v1409 = vld [vmem:[%s1286 + $0x3d0] sm:$0xff]
        %v1410 = vld [vmem:[%s1286 + $0x3d8] sm:$0xff]
        %v1411 = vld [vmem:[%s1286 + $0x3e0] sm:$0xff]
        %v1412 = vld [vmem:[%s1286 + $0x3e8] sm:$0xff]
        %v1413 = vld [vmem:[%s1286 + $0x3f0] sm:$0xff]
        %v1414 = vld [vmem:[%s1286 + $0x3f8] sm:$0xff]
        %v1543 = vunpack.c.l.b16 %v1287
        %v1544 = vunpack.c.h.b16 %v1287
        %v1545 = vunpack.c.l.b16 %v1288
        %v1546 = vunpack.c.h.b16 %v1288
        %v1547 = vunpack.c.l.b16 %v1289
        %v1548 = vunpack.c.h.b16 %v1289
        %v1549 = vunpack.c.l.b16 %v1290
        %v1550 = vunpack.c.h.b16 %v1290
        %v1551 = vunpack.c.l.b16 %v1291
        %v1552 = vunpack.c.h.b16 %v1291
        %v1553 = vunpack.c.l.b16 %v1292
        %v1554 = vunpack.c.h.b16 %v1292
        %v1555 = vunpack.c.l.b16 %v1293
        %v1556 = vunpack.c.h.b16 %v1293
        %v1557 = vunpack.c.l.b16 %v1294
        %v1558 = vunpack.c.h.b16 %v1294
        %v1559 = vunpack.c.l.b16 %v1295
        %v1560 = vunpack.c.h.b16 %v1295
        %v1561 = vunpack.c.l.b16 %v1296
        %v1562 = vunpack.c.h.b16 %v1296
        %v1563 = vunpack.c.l.b16 %v1297
        %v1564 = vunpack.c.h.b16 %v1297
        %v1565 = vunpack.c.l.b16 %v1298
        %v1566 = vunpack.c.h.b16 %v1298
        %v1567 = vunpack.c.l.b16 %v1299
        %v1568 = vunpack.c.h.b16 %v1299
        %v1569 = vunpack.c.l.b16 %v1300
        %v1570 = vunpack.c.h.b16 %v1300
        %v1571 = vunpack.c.l.b16 %v1301
        %v1572 = vunpack.c.h.b16 %v1301
        %v1573 = vunpack.c.l.b16 %v1302
        %v1574 = vunpack.c.h.b16 %v1302
        %v1575 = vunpack.c.l.b16 %v1303
        %v1576 = vunpack.c.h.b16 %v1303
        %v1577 = vunpack.c.l.b16 %v1304
        %v1578 = vunpack.c.h.b16 %v1304
        %v1579 = vunpack.c.l.b16 %v1305
        %v1580 = vunpack.c.h.b16 %v1305
        %v1581 = vunpack.c.l.b16 %v1306
        %v1582 = vunpack.c.h.b16 %v1306
        %v1583 = vunpack.c.l.b16 %v1307
        %v1584 = vunpack.c.h.b16 %v1307
        %v1585 = vunpack.c.l.b16 %v1308
        %v1586 = vunpack.c.h.b16 %v1308
        %v1587 = vunpack.c.l.b16 %v1309
        %v1588 = vunpack.c.h.b16 %v1309
        %v1589 = vunpack.c.l.b16 %v1310
        %v1590 = vunpack.c.h.b16 %v1310
        %v1591 = vunpack.c.l.b16 %v1311
        %v1592 = vunpack.c.h.b16 %v1311
        %v1593 = vunpack.c.l.b16 %v1312
        %v1594 = vunpack.c.h.b16 %v1312
        %v1595 = vunpack.c.l.b16 %v1313
        %v1596 = vunpack.c.h.b16 %v1313
        %v1597 = vunpack.c.l.b16 %v1314
        %v1598 = vunpack.c.h.b16 %v1314
        %v1599 = vunpack.c.l.b16 %v1315
        %v1600 = vunpack.c.h.b16 %v1315
        %v1601 = vunpack.c.l.b16 %v1316
        %v1602 = vunpack.c.h.b16 %v1316
        %v1603 = vunpack.c.l.b16 %v1317
        %v1604 = vunpack.c.h.b16 %v1317
        %v1605 = vunpack.c.l.b16 %v1318
        %v1606 = vunpack.c.h.b16 %v1318
        %v1607 = vunpack.c.l.b16 %v1319
        %v1608 = vunpack.c.h.b16 %v1319
        %v1609 = vunpack.c.l.b16 %v1320
        %v1610 = vunpack.c.h.b16 %v1320
        %v1611 = vunpack.c.l.b16 %v1321
        %v1612 = vunpack.c.h.b16 %v1321
        %v1613 = vunpack.c.l.b16 %v1322
        %v1614 = vunpack.c.h.b16 %v1322
        %v1615 = vunpack.c.l.b16 %v1323
        %v1616 = vunpack.c.h.b16 %v1323
        %v1617 = vunpack.c.l.b16 %v1324
        %v1618 = vunpack.c.h.b16 %v1324
        %v1619 = vunpack.c.l.b16 %v1325
        %v1620 = vunpack.c.h.b16 %v1325
        %v1621 = vunpack.c.l.b16 %v1326
        %v1622 = vunpack.c.h.b16 %v1326
        %v1623 = vunpack.c.l.b16 %v1327
        %v1624 = vunpack.c.h.b16 %v1327
        %v1625 = vunpack.c.l.b16 %v1328
        %v1626 = vunpack.c.h.b16 %v1328
        %v1627 = vunpack.c.l.b16 %v1329
        %v1628 = vunpack.c.h.b16 %v1329
        %v1629 = vunpack.c.l.b16 %v1330
        %v1630 = vunpack.c.h.b16 %v1330
        %v1631 = vunpack.c.l.b16 %v1331
        %v1632 = vunpack.c.h.b16 %v1331
        %v1633 = vunpack.c.l.b16 %v1332
        %v1634 = vunpack.c.h.b16 %v1332
        %v1635 = vunpack.c.l.b16 %v1333
        %v1636 = vunpack.c.h.b16 %v1333
        %v1637 = vunpack.c.l.b16 %v1334
        %v1638 = vunpack.c.h.b16 %v1334
        %v1639 = vunpack.c.l.b16 %v1335
        %v1640 = vunpack.c.h.b16 %v1335
        %v1641 = vunpack.c.l.b16 %v1336
        %v1642 = vunpack.c.h.b16 %v1336
        %v1643 = vunpack.c.l.b16 %v1337
        %v1644 = vunpack.c.h.b16 %v1337
        %v1645 = vunpack.c.l.b16 %v1338
        %v1646 = vunpack.c.h.b16 %v1338
        %v1647 = vunpack.c.l.b16 %v1339
        %v1648 = vunpack.c.h.b16 %v1339
        %v1649 = vunpack.c.l.b16 %v1340
        %v1650 = vunpack.c.h.b16 %v1340
        %v1651 = vunpack.c.l.b16 %v1341
        %v1652 = vunpack.c.h.b16 %v1341
        %v1653 = vunpack.c.l.b16 %v1342
        %v1654 = vunpack.c.h.b16 %v1342
        %v1655 = vunpack.c.l.b16 %v1343
        %v1656 = vunpack.c.h.b16 %v1343
        %v1657 = vunpack.c.l.b16 %v1344
        %v1658 = vunpack.c.h.b16 %v1344
        %v1659 = vunpack.c.l.b16 %v1345
        %v1660 = vunpack.c.h.b16 %v1345
        %v1661 = vunpack.c.l.b16 %v1346
        %v1662 = vunpack.c.h.b16 %v1346
        %v1663 = vunpack.c.l.b16 %v1347
        %v1664 = vunpack.c.h.b16 %v1347
        %v1665 = vunpack.c.l.b16 %v1348
        %v1666 = vunpack.c.h.b16 %v1348
        %v1667 = vunpack.c.l.b16 %v1349
        %v1668 = vunpack.c.h.b16 %v1349
        %v1669 = vunpack.c.l.b16 %v1350
        %v1670 = vunpack.c.h.b16 %v1350
        %v1671 = vunpack.c.l.b16 %v1351
        %v1672 = vunpack.c.h.b16 %v1351
        %v1673 = vunpack.c.l.b16 %v1352
        %v1674 = vunpack.c.h.b16 %v1352
        %v1675 = vunpack.c.l.b16 %v1353
        %v1676 = vunpack.c.h.b16 %v1353
        %v1677 = vunpack.c.l.b16 %v1354
        %v1678 = vunpack.c.h.b16 %v1354
        %v1679 = vunpack.c.l.b16 %v1355
        %v1680 = vunpack.c.h.b16 %v1355
        %v1681 = vunpack.c.l.b16 %v1356
        %v1682 = vunpack.c.h.b16 %v1356
        %v1683 = vunpack.c.l.b16 %v1357
        %v1684 = vunpack.c.h.b16 %v1357
        %v1685 = vunpack.c.l.b16 %v1358
        %v1686 = vunpack.c.h.b16 %v1358
        %v1687 = vunpack.c.l.b16 %v1359
        %v1688 = vunpack.c.h.b16 %v1359
        %v1689 = vunpack.c.l.b16 %v1360
        %v1690 = vunpack.c.h.b16 %v1360
        %v1691 = vunpack.c.l.b16 %v1361
        %v1692 = vunpack.c.h.b16 %v1361
        %v1693 = vunpack.c.l.b16 %v1362
        %v1694 = vunpack.c.h.b16 %v1362
        %v1695 = vunpack.c.l.b16 %v1363
        %v1696 = vunpack.c.h.b16 %v1363
        %v1697 = vunpack.c.l.b16 %v1364
        %v1698 = vunpack.c.h.b16 %v1364
        %v1699 = vunpack.c.l.b16 %v1365
        %v1700 = vunpack.c.h.b16 %v1365
        %v1701 = vunpack.c.l.b16 %v1366
        %v1702 = vunpack.c.h.b16 %v1366
        %v1703 = vunpack.c.l.b16 %v1367
        %v1704 = vunpack.c.h.b16 %v1367
        %v1705 = vunpack.c.l.b16 %v1368
        %v1706 = vunpack.c.h.b16 %v1368
        %v1707 = vunpack.c.l.b16 %v1369
        %v1708 = vunpack.c.h.b16 %v1369
        %v1709 = vunpack.c.l.b16 %v1370
        %v1710 = vunpack.c.h.b16 %v1370
        %v1711 = vunpack.c.l.b16 %v1371
        %v1712 = vunpack.c.h.b16 %v1371
        %v1713 = vunpack.c.l.b16 %v1372
        %v1714 = vunpack.c.h.b16 %v1372
        %v1715 = vunpack.c.l.b16 %v1373
        %v1716 = vunpack.c.h.b16 %v1373
        %v1717 = vunpack.c.l.b16 %v1374
        %v1718 = vunpack.c.h.b16 %v1374
        %v1719 = vunpack.c.l.b16 %v1375
        %v1720 = vunpack.c.h.b16 %v1375
        %v1721 = vunpack.c.l.b16 %v1376
        %v1722 = vunpack.c.h.b16 %v1376
        %v1723 = vunpack.c.l.b16 %v1377
        %v1724 = vunpack.c.h.b16 %v1377
        %v1725 = vunpack.c.l.b16 %v1378
        %v1726 = vunpack.c.h.b16 %v1378
        %v1727 = vunpack.c.l.b16 %v1379
        %v1728 = vunpack.c.h.b16 %v1379
        %v1729 = vunpack.c.l.b16 %v1380
        %v1730 = vunpack.c.h.b16 %v1380
        %v1731 = vunpack.c.l.b16 %v1381
        %v1732 = vunpack.c.h.b16 %v1381
        %v1733 = vunpack.c.l.b16 %v1382
        %v1734 = vunpack.c.h.b16 %v1382
        %v1735 = vunpack.c.l.b16 %v1383
        %v1736 = vunpack.c.h.b16 %v1383
        %v1737 = vunpack.c.l.b16 %v1384
        %v1738 = vunpack.c.h.b16 %v1384
        %v1739 = vunpack.c.l.b16 %v1385
        %v1740 = vunpack.c.h.b16 %v1385
        %v1741 = vunpack.c.l.b16 %v1386
        %v1742 = vunpack.c.h.b16 %v1386
        %v1743 = vunpack.c.l.b16 %v1387
        %v1744 = vunpack.c.h.b16 %v1387
        %v1745 = vunpack.c.l.b16 %v1388
        %v1746 = vunpack.c.h.b16 %v1388
        %v1747 = vunpack.c.l.b16 %v1389
        %v1748 = vunpack.c.h.b16 %v1389
        %v1749 = vunpack.c.l.b16 %v1390
        %v1750 = vunpack.c.h.b16 %v1390
        %v1751 = vunpack.c.l.b16 %v1391
        %v1752 = vunpack.c.h.b16 %v1391
        %v1753 = vunpack.c.l.b16 %v1392
        %v1754 = vunpack.c.h.b16 %v1392
        %v1755 = vunpack.c.l.b16 %v1393
        %v1756 = vunpack.c.h.b16 %v1393
        %v1757 = vunpack.c.l.b16 %v1394
        %v1758 = vunpack.c.h.b16 %v1394
        %v1759 = vunpack.c.l.b16 %v1395
        %v1760 = vunpack.c.h.b16 %v1395
        %v1761 = vunpack.c.l.b16 %v1396
        %v1762 = vunpack.c.h.b16 %v1396
        %v1763 = vunpack.c.l.b16 %v1397
        %v1764 = vunpack.c.h.b16 %v1397
        %v1765 = vunpack.c.l.b16 %v1398
        %v1766 = vunpack.c.h.b16 %v1398
        %v1767 = vunpack.c.l.b16 %v1399
        %v1768 = vunpack.c.h.b16 %v1399
        %v1769 = vunpack.c.l.b16 %v1400
        %v1770 = vunpack.c.h.b16 %v1400
        %v1771 = vunpack.c.l.b16 %v1401
        %v1772 = vunpack.c.h.b16 %v1401
        %v1773 = vunpack.c.l.b16 %v1402
        %v1774 = vunpack.c.h.b16 %v1402
        %v1775 = vunpack.c.l.b16 %v1403
        %v1776 = vunpack.c.h.b16 %v1403
        %v1777 = vunpack.c.l.b16 %v1404
        %v1778 = vunpack.c.h.b16 %v1404
        %v1779 = vunpack.c.l.b16 %v1405
        %v1780 = vunpack.c.h.b16 %v1405
        %v1781 = vunpack.c.l.b16 %v1406
        %v1782 = vunpack.c.h.b16 %v1406
        %v1783 = vunpack.c.l.b16 %v1407
        %v1784 = vunpack.c.h.b16 %v1407
        %v1785 = vunpack.c.l.b16 %v1408
        %v1786 = vunpack.c.h.b16 %v1408
        %v1787 = vunpack.c.l.b16 %v1409
        %v1788 = vunpack.c.h.b16 %v1409
        %v1789 = vunpack.c.l.b16 %v1410
        %v1790 = vunpack.c.h.b16 %v1410
        %v1791 = vunpack.c.l.b16 %v1411
        %v1792 = vunpack.c.h.b16 %v1411
        %v1793 = vunpack.c.l.b16 %v1412
        %v1794 = vunpack.c.h.b16 %v1412
        %v1795 = vunpack.c.l.b16 %v1413
        %v1796 = vunpack.c.h.b16 %v1413
        %v1797 = vunpack.c.l.b16 %v1414
        %v1798 = vunpack.c.h.b16 %v1414
        %v1799 = vpack.c.b16 %v1547, %v1543
        %v1800 = vpack.c.b16 %v1548, %v1544
        %v1801 = vpack.c.b16 %v1549, %v1545
        %v1802 = vpack.c.b16 %v1550, %v1546
        %v1803 = vpack.c.b16 %v1555, %v1551
        %v1804 = vpack.c.b16 %v1556, %v1552
        %v1805 = vpack.c.b16 %v1557, %v1553
        %v1806 = vpack.c.b16 %v1558, %v1554
        %v1807 = vpack.c.b16 %v1563, %v1559
        %v1808 = vpack.c.b16 %v1564, %v1560
        %v1809 = vpack.c.b16 %v1565, %v1561
        %v1810 = vpack.c.b16 %v1566, %v1562
        %v1811 = vpack.c.b16 %v1571, %v1567
        %v1812 = vpack.c.b16 %v1572, %v1568
        %v1813 = vpack.c.b16 %v1573, %v1569
        %v1814 = vpack.c.b16 %v1574, %v1570
        %v1815 = vpack.c.b16 %v1579, %v1575
        %v1816 = vpack.c.b16 %v1580, %v1576
        %v1817 = vpack.c.b16 %v1581, %v1577
        %v1818 = vpack.c.b16 %v1582, %v1578
        %v1819 = vpack.c.b16 %v1587, %v1583
        %v1820 = vpack.c.b16 %v1588, %v1584
        %v1821 = vpack.c.b16 %v1589, %v1585
        %v1822 = vpack.c.b16 %v1590, %v1586
        %v1823 = vpack.c.b16 %v1595, %v1591
        %v1824 = vpack.c.b16 %v1596, %v1592
        %v1825 = vpack.c.b16 %v1597, %v1593
        %v1826 = vpack.c.b16 %v1598, %v1594
        %v1827 = vpack.c.b16 %v1603, %v1599
        %v1828 = vpack.c.b16 %v1604, %v1600
        %v1829 = vpack.c.b16 %v1605, %v1601
        %v1830 = vpack.c.b16 %v1606, %v1602
        %v1831 = vpack.c.b16 %v1611, %v1607
        %v1832 = vpack.c.b16 %v1612, %v1608
        %v1833 = vpack.c.b16 %v1613, %v1609
        %v1834 = vpack.c.b16 %v1614, %v1610
        %v1835 = vpack.c.b16 %v1619, %v1615
        %v1836 = vpack.c.b16 %v1620, %v1616
        %v1837 = vpack.c.b16 %v1621, %v1617
        %v1838 = vpack.c.b16 %v1622, %v1618
        %v1839 = vpack.c.b16 %v1627, %v1623
        %v1840 = vpack.c.b16 %v1628, %v1624
        %v1841 = vpack.c.b16 %v1629, %v1625
        %v1842 = vpack.c.b16 %v1630, %v1626
        %v1843 = vpack.c.b16 %v1635, %v1631
        %v1844 = vpack.c.b16 %v1636, %v1632
        %v1845 = vpack.c.b16 %v1637, %v1633
        %v1846 = vpack.c.b16 %v1638, %v1634
        %v1847 = vpack.c.b16 %v1643, %v1639
        %v1848 = vpack.c.b16 %v1644, %v1640
        %v1849 = vpack.c.b16 %v1645, %v1641
        %v1850 = vpack.c.b16 %v1646, %v1642
        %v1851 = vpack.c.b16 %v1651, %v1647
        %v1852 = vpack.c.b16 %v1652, %v1648
        %v1853 = vpack.c.b16 %v1653, %v1649
        %v1854 = vpack.c.b16 %v1654, %v1650
        %v1855 = vpack.c.b16 %v1659, %v1655
        %v1856 = vpack.c.b16 %v1660, %v1656
        %v1857 = vpack.c.b16 %v1661, %v1657
        %v1858 = vpack.c.b16 %v1662, %v1658
        %v1859 = vpack.c.b16 %v1667, %v1663
        %v1860 = vpack.c.b16 %v1668, %v1664
        %v1861 = vpack.c.b16 %v1669, %v1665
        %v1862 = vpack.c.b16 %v1670, %v1666
        %v1863 = vpack.c.b16 %v1675, %v1671
        %v1864 = vpack.c.b16 %v1676, %v1672
        %v1865 = vpack.c.b16 %v1677, %v1673
        %v1866 = vpack.c.b16 %v1678, %v1674
        %v1867 = vpack.c.b16 %v1683, %v1679
        %v1868 = vpack.c.b16 %v1684, %v1680
        %v1869 = vpack.c.b16 %v1685, %v1681
        %v1870 = vpack.c.b16 %v1686, %v1682
        %v1871 = vpack.c.b16 %v1691, %v1687
        %v1872 = vpack.c.b16 %v1692, %v1688
        %v1873 = vpack.c.b16 %v1693, %v1689
        %v1874 = vpack.c.b16 %v1694, %v1690
        %v1875 = vpack.c.b16 %v1699, %v1695
        %v1876 = vpack.c.b16 %v1700, %v1696
        %v1877 = vpack.c.b16 %v1701, %v1697
        %v1878 = vpack.c.b16 %v1702, %v1698
        %v1879 = vpack.c.b16 %v1707, %v1703
        %v1880 = vpack.c.b16 %v1708, %v1704
        %v1881 = vpack.c.b16 %v1709, %v1705
        %v1882 = vpack.c.b16 %v1710, %v1706
        %v1883 = vpack.c.b16 %v1715, %v1711
        %v1884 = vpack.c.b16 %v1716, %v1712
        %v1885 = vpack.c.b16 %v1717, %v1713
        %v1886 = vpack.c.b16 %v1718, %v1714
        %v1887 = vpack.c.b16 %v1723, %v1719
        %v1888 = vpack.c.b16 %v1724, %v1720
        %v1889 = vpack.c.b16 %v1725, %v1721
        %v1890 = vpack.c.b16 %v1726, %v1722
        %v1891 = vpack.c.b16 %v1731, %v1727
        %v1892 = vpack.c.b16 %v1732, %v1728
        %v1893 = vpack.c.b16 %v1733, %v1729
        %v1894 = vpack.c.b16 %v1734, %v1730
        %v1895 = vpack.c.b16 %v1739, %v1735
        %v1896 = vpack.c.b16 %v1740, %v1736
        %v1897 = vpack.c.b16 %v1741, %v1737
        %v1898 = vpack.c.b16 %v1742, %v1738
        %v1899 = vpack.c.b16 %v1747, %v1743
        %v1900 = vpack.c.b16 %v1748, %v1744
        %v1901 = vpack.c.b16 %v1749, %v1745
        %v1902 = vpack.c.b16 %v1750, %v1746
        %v1903 = vpack.c.b16 %v1755, %v1751
        %v1904 = vpack.c.b16 %v1756, %v1752
        %v1905 = vpack.c.b16 %v1757, %v1753
        %v1906 = vpack.c.b16 %v1758, %v1754
        %v1907 = vpack.c.b16 %v1763, %v1759
        %v1908 = vpack.c.b16 %v1764, %v1760
        %v1909 = vpack.c.b16 %v1765, %v1761
        %v1910 = vpack.c.b16 %v1766, %v1762
        %v1911 = vpack.c.b16 %v1771, %v1767
        %v1912 = vpack.c.b16 %v1772, %v1768
        %v1913 = vpack.c.b16 %v1773, %v1769
        %v1914 = vpack.c.b16 %v1774, %v1770
        %v1915 = vpack.c.b16 %v1779, %v1775
        %v1916 = vpack.c.b16 %v1780, %v1776
        %v1917 = vpack.c.b16 %v1781, %v1777
        %v1918 = vpack.c.b16 %v1782, %v1778
        %v1919 = vpack.c.b16 %v1787, %v1783
        %v1920 = vpack.c.b16 %v1788, %v1784
        %v1921 = vpack.c.b16 %v1789, %v1785
        %v1922 = vpack.c.b16 %v1790, %v1786
        %v1923 = vpack.c.b16 %v1795, %v1791
        %v1924 = vpack.c.b16 %v1796, %v1792
        %v1925 = vpack.c.b16 %v1797, %v1793
        %v1926 = vpack.c.b16 %v1798, %v1794
        %2055 = vmatprep.subr.bf16.mxu0 %v1800
        %2056 = vmatpush1.bf16.msra.mxu0 %v1799
        %2057 = vmatprep.subr.bf16.mxu0 %v1804
        %2058 = vmatpush1.bf16.msra.mxu0 %v1803
        %2059 = vmatprep.subr.bf16.mxu0 %v1808
        %2060 = vmatpush1.bf16.msra.mxu0 %v1807
        %2061 = vmatprep.subr.bf16.mxu0 %v1812
        %2062 = vmatpush1.bf16.msra.mxu0 %v1811
        %2063 = vmatprep.subr.bf16.mxu0 %v1816
        %2064 = vmatpush1.bf16.msra.mxu0 %v1815
        %2065 = vmatprep.subr.bf16.mxu0 %v1820
        %2066 = vmatpush1.bf16.msra.mxu0 %v1819
        %2067 = vmatprep.subr.bf16.mxu0 %v1824
        %2068 = vmatpush1.bf16.msra.mxu0 %v1823
        %2069 = vmatprep.subr.bf16.mxu0 %v1828
        %2070 = vmatpush1.bf16.msra.mxu0 %v1827
        %2071 = vmatprep.subr.bf16.mxu0 %v1832
        %2072 = vmatpush1.bf16.msra.mxu0 %v1831
        %2073 = vmatprep.subr.bf16.mxu0 %v1836
        %2074 = vmatpush1.bf16.msra.mxu0 %v1835
        %2075 = vmatprep.subr.bf16.mxu0 %v1840
        %2076 = vmatpush1.bf16.msra.mxu0 %v1839
        %2077 = vmatprep.subr.bf16.mxu0 %v1844
        %2078 = vmatpush1.bf16.msra.mxu0 %v1843
        %2079 = vmatprep.subr.bf16.mxu0 %v1848
        %2080 = vmatpush1.bf16.msra.mxu0 %v1847
        %2081 = vmatprep.subr.bf16.mxu0 %v1852
        %2082 = vmatpush1.bf16.msra.mxu0 %v1851
        %2083 = vmatprep.subr.bf16.mxu0 %v1856
        %2084 = vmatpush1.bf16.msra.mxu0 %v1855
        %2085 = vmatprep.subr.bf16.mxu0 %v1860
        %2086 = vmatpush1.bf16.msra.mxu0 %v1859
        %2087 = vmatprep.mubr.bf16.mxu0 %v1283
        %2088 = vmatmul.mubr.bf16.gmra.mrb[0].mxu0 %v1282
        %v2089 = vpop.f32.mrb[0].mxu0
        %v2090 = vadd.f32 0.0, %v2089
        %v2091 = vpop.f32.mrb[0].mxu0
        %v2092 = vadd.f32 0.0, %v2091
        %v2093 = vpop.f32.mrb[0].mxu0
        %v2094 = vpop.f32.mrb[0].mxu0
        %2095 = vdwg.mxu0
        %2096 = vmatprep.subr.bf16.mxu0 %v1864
        %2097 = vmatpush1.bf16.msra.mxu0 %v1863
        %2098 = vmatprep.subr.bf16.mxu0 %v1868
        %2099 = vmatpush1.bf16.msra.mxu0 %v1867
        %2100 = vmatprep.subr.bf16.mxu0 %v1872
        %2101 = vmatpush1.bf16.msra.mxu0 %v1871
        %2102 = vmatprep.subr.bf16.mxu0 %v1876
        %2103 = vmatpush1.bf16.msra.mxu0 %v1875
        %2104 = vmatprep.subr.bf16.mxu0 %v1880
        %2105 = vmatpush1.bf16.msra.mxu0 %v1879
        %2106 = vmatprep.subr.bf16.mxu0 %v1884
        %2107 = vmatpush1.bf16.msra.mxu0 %v1883
        %2108 = vmatprep.subr.bf16.mxu0 %v1888
        %2109 = vmatpush1.bf16.msra.mxu0 %v1887
        %2110 = vmatprep.subr.bf16.mxu0 %v1892
        %2111 = vmatpush1.bf16.msra.mxu0 %v1891
        %2112 = vmatprep.subr.bf16.mxu0 %v1896
        %2113 = vmatpush1.bf16.msra.mxu0 %v1895
        %2114 = vmatprep.subr.bf16.mxu0 %v1900
        %2115 = vmatpush1.bf16.msra.mxu0 %v1899
        %2116 = vmatprep.subr.bf16.mxu0 %v1904
        %2117 = vmatpush1.bf16.msra.mxu0 %v1903
        %2118 = vmatprep.subr.bf16.mxu0 %v1908
        %2119 = vmatpush1.bf16.msra.mxu0 %v1907
        %2120 = vmatprep.subr.bf16.mxu0 %v1912
        %2121 = vmatpush1.bf16.msra.mxu0 %v1911
        %2122 = vmatprep.subr.bf16.mxu0 %v1916
        %2123 = vmatpush1.bf16.msra.mxu0 %v1915
        %2124 = vmatprep.subr.bf16.mxu0 %v1920
        %2125 = vmatpush1.bf16.msra.mxu0 %v1919
        %2126 = vmatprep.subr.bf16.mxu0 %v1924
        %2127 = vmatpush1.bf16.msra.mxu0 %v1923
        %2128 = vmatprep.mubr.bf16.mxu0 %v1285
        %2129 = vmatmul.mubr.bf16.gmra.mrb[0].mxu0 %v1284
        %v2130 = vpop.f32.mrb[0].mxu0
        %v2131 = vadd.f32 %v2090, %v2130
        %v2132 = vpop.f32.mrb[0].mxu0
        %v2133 = vadd.f32 %v2092, %v2132
        %v2134 = vpop.f32.mrb[0].mxu0
        %v2135 = vpop.f32.mrb[0].mxu0
        %2136 = vdwg.mxu0
        %2137 = vmatprep.subr.bf16.mxu0 %v1802
        %2138 = vmatpush1.bf16.msra.mxu0 %v1801
        %2139 = vmatprep.subr.bf16.mxu0 %v1806
        %2140 = vmatpush1.bf16.msra.mxu0 %v1805
        %2141 = vmatprep.subr.bf16.mxu0 %v1810
        %2142 = vmatpush1.bf16.msra.mxu0 %v1809
        %2143 = vmatprep.subr.bf16.mxu0 %v1814
        %2144 = vmatpush1.bf16.msra.mxu0 %v1813
        %2145 = vmatprep.subr.bf16.mxu0 %v1818
        %2146 = vmatpush1.bf16.msra.mxu0 %v1817
        %2147 = vmatprep.subr.bf16.mxu0 %v1822
        %2148 = vmatpush1.bf16.msra.mxu0 %v1821
        %2149 = vmatprep.subr.bf16.mxu0 %v1826
        %2150 = vmatpush1.bf16.msra.mxu0 %v1825
        %2151 = vmatprep.subr.bf16.mxu0 %v1830
        %2152 = vmatpush1.bf16.msra.mxu0 %v1829
        %2153 = vmatprep.subr.bf16.mxu0 %v1834
        %2154 = vmatpush1.bf16.msra.mxu0 %v1833
        %2155 = vmatprep.subr.bf16.mxu0 %v1838
        %2156 = vmatpush1.bf16.msra.mxu0 %v1837
        %2157 = vmatprep.subr.bf16.mxu0 %v1842
        %2158 = vmatpush1.bf16.msra.mxu0 %v1841
        %2159 = vmatprep.subr.bf16.mxu0 %v1846
        %2160 = vmatpush1.bf16.msra.mxu0 %v1845
        %2161 = vmatprep.subr.bf16.mxu0 %v1850
        %2162 = vmatpush1.bf16.msra.mxu0 %v1849
        %2163 = vmatprep.subr.bf16.mxu0 %v1854
        %2164 = vmatpush1.bf16.msra.mxu0 %v1853
        %2165 = vmatprep.subr.bf16.mxu0 %v1858
        %2166 = vmatpush1.bf16.msra.mxu0 %v1857
        %2167 = vmatprep.subr.bf16.mxu0 %v1862
        %2168 = vmatpush1.bf16.msra.mxu0 %v1861
        %2169 = vmatprep.mubr.bf16.mxu0 %v1283
        %2170 = vmatmul.mubr.bf16.gmra.mrb[0].mxu0 %v1282
        %v2171 = vpop.f32.mrb[0].mxu0
        %v2172 = vadd.f32 0.0, %v2171
        %v2173 = vpop.f32.mrb[0].mxu0
        %v2174 = vadd.f32 0.0, %v2173
        %v2175 = vpop.f32.mrb[0].mxu0
        %v2176 = vpop.f32.mrb[0].mxu0
        %2177 = vdwg.mxu0
        %2178 = vmatprep.subr.bf16.mxu0 %v1866
        %2179 = vmatpush1.bf16.msra.mxu0 %v1865
        %2180 = vmatprep.subr.bf16.mxu0 %v1870
        %2181 = vmatpush1.bf16.msra.mxu0 %v1869
        %2182 = vmatprep.subr.bf16.mxu0 %v1874
        %2183 = vmatpush1.bf16.msra.mxu0 %v1873
        %2184 = vmatprep.subr.bf16.mxu0 %v1878
        %2185 = vmatpush1.bf16.msra.mxu0 %v1877
        %2186 = vmatprep.subr.bf16.mxu0 %v1882
        %2187 = vmatpush1.bf16.msra.mxu0 %v1881
        %2188 = vmatprep.subr.bf16.mxu0 %v1886
        %2189 = vmatpush1.bf16.msra.mxu0 %v1885
        %2190 = vmatprep.subr.bf16.mxu0 %v1890
        %2191 = vmatpush1.bf16.msra.mxu0 %v1889
        %2192 = vmatprep.subr.bf16.mxu0 %v1894
        %2193 = vmatpush1.bf16.msra.mxu0 %v1893
        %2194 = vmatprep.subr.bf16.mxu0 %v1898
        %2195 = vmatpush1.bf16.msra.mxu0 %v1897
        %2196 = vmatprep.subr.bf16.mxu0 %v1902
        %2197 = vmatpush1.bf16.msra.mxu0 %v1901
        %2198 = vmatprep.subr.bf16.mxu0 %v1906
        %2199 = vmatpush1.bf16.msra.mxu0 %v1905
        %2200 = vmatprep.subr.bf16.mxu0 %v1910
        %2201 = vmatpush1.bf16.msra.mxu0 %v1909
        %2202 = vmatprep.subr.bf16.mxu0 %v1914
        %2203 = vmatpush1.bf16.msra.mxu0 %v1913
        %2204 = vmatprep.subr.bf16.mxu0 %v1918
        %2205 = vmatpush1.bf16.msra.mxu0 %v1917
        %2206 = vmatprep.subr.bf16.mxu0 %v1922
        %2207 = vmatpush1.bf16.msra.mxu0 %v1921
        %2208 = vmatprep.subr.bf16.mxu0 %v1926
        %2209 = vmatpush1.bf16.msra.mxu0 %v1925
        %2210 = vmatprep.mubr.bf16.mxu0 %v1285
        %2211 = vmatmul.mubr.bf16.gmra.mrb[0].mxu0 %v1284
        %v2212 = vpop.f32.mrb[0].mxu0
        %v2213 = vadd.f32 %v2172, %v2212
        %v2214 = vpop.f32.mrb[0].mxu0
        %v2215 = vadd.f32 %v2174, %v2214
        %v2216 = vpop.f32.mrb[0].mxu0
        %v2217 = vpop.f32.mrb[0].mxu0
        %2218 = vdwg.mxu0
        %s2219 = scalar_lea.vmem [#allocation7], 8
        %v2220 = vld [vmem:[%s2219] ss:$2 sm:$0xf]
        %v2222 = vlaneseq
        %v2223 = vshrl.u32 %v2222, 7
        %v2224 = vsub.s32 0, %v2223
        %v2225 = vrot.slane %v2220, %v2224
        %v2226 = vlaneseq
        %v2227 = vshrl.u32 %v2226, 7
        %v2228 = vsub.s32 1, %v2227
        %v2229 = vrot.slane %v2220, %v2228
        %v2230 = vlaneseq
        %v2231 = vshrl.u32 %v2230, 7
        %v2232 = vsub.s32 2, %v2231
        %v2233 = vrot.slane %v2220, %v2232
        %v2234 = vlaneseq
        %v2235 = vshrl.u32 %v2234, 7
        %v2236 = vsub.s32 3, %v2235
        %v2237 = vrot.slane %v2220, %v2236
        %v2242 = vmul.f32 %v2131, %v2225
        %v2243 = vmul.f32 %v2133, %v2229
        %v2244 = vmul.f32 %v2213, %v2233
        %v2245 = vmul.f32 %v2215, %v2237
        %s2246 = scalar_lea.vmem %s2219, 1 [#allocation7]
        %v2247 = vld [vmem:[%s2246] ss:$2 sm:$0xf]
        %v2249 = vlaneseq
        %v2250 = vshrl.u32 %v2249, 7
        %v2251 = vsub.s32 0, %v2250
        %v2252 = vrot.slane %v2247, %v2251
        %v2253 = vlaneseq
        %v2254 = vshrl.u32 %v2253, 7
        %v2255 = vsub.s32 1, %v2254
        %v2256 = vrot.slane %v2247, %v2255
        %v2257 = vlaneseq
        %v2258 = vshrl.u32 %v2257, 7
        %v2259 = vsub.s32 2, %v2258
        %v2260 = vrot.slane %v2247, %v2259
        %v2261 = vlaneseq
        %v2262 = vshrl.u32 %v2261, 7
        %v2263 = vsub.s32 3, %v2262
        %v2264 = vrot.slane %v2247, %v2263
        %v2269 = vadd.f32 %v2242, %v2252
        %v2270 = vadd.f32 %v2243, %v2256
        %v2271 = vadd.f32 %v2244, %v2260
        %v2272 = vadd.f32 %v2245, %v2264
        %v2273 = vadd.f32 %v2269, %v285
        %v2274 = vadd.f32 %v2270, %v286
        %v2275 = vadd.f32 %v2271, %v287
        %v2276 = vadd.f32 %v2272, %v288
        %v2277 = vmax.f32 %v2273, 0.0
        %v2278 = vmax.f32 %v2274, 0.0
        %v2279 = vmax.f32 %v2275, 0.0
        %v2280 = vmax.f32 %v2276, 0.0
        %v2281 = vpack.c.bf16 %v2277, %v2277
        %v2282 = vpack.c.bf16 %v2278, %v2278
        %v2283 = vpack.c.bf16 %v2279, %v2279
        %v2284 = vpack.c.bf16 %v2280, %v2280
        %v2285 = vld [vmem:[#allocation8] sm:$0xff]
        %v2286 = vld [vmem:[#allocation8 + $0x8] sm:$0xff]
        %v2287 = vld [vmem:[#allocation8 + $0x10] sm:$0xff]
        %v2288 = vld [vmem:[#allocation8 + $0x18] sm:$0xff]
        %v2289 = vld [vmem:[#allocation8 + $0x20] sm:$0xff]
        %v2290 = vld [vmem:[#allocation8 + $0x28] sm:$0xff]
        %v2291 = vld [vmem:[#allocation8 + $0x30] sm:$0xff]
        %v2292 = vld [vmem:[#allocation8 + $0x38] sm:$0xff]
        %v2293 = vld [vmem:[#allocation8 + $0x40] sm:$0xff]
        %v2294 = vld [vmem:[#allocation8 + $0x48] sm:$0xff]
        %v2295 = vld [vmem:[#allocation8 + $0x50] sm:$0xff]
        %v2296 = vld [vmem:[#allocation8 + $0x58] sm:$0xff]
        %v2297 = vld [vmem:[#allocation8 + $0x60] sm:$0xff]
        %v2298 = vld [vmem:[#allocation8 + $0x68] sm:$0xff]
        %v2299 = vld [vmem:[#allocation8 + $0x70] sm:$0xff]
        %v2300 = vld [vmem:[#allocation8 + $0x78] sm:$0xff]
        %v2301 = vld [vmem:[#allocation8 + $0x80] sm:$0xff]
        %v2302 = vld [vmem:[#allocation8 + $0x88] sm:$0xff]
        %v2303 = vld [vmem:[#allocation8 + $0x90] sm:$0xff]
        %v2304 = vld [vmem:[#allocation8 + $0x98] sm:$0xff]
        %v2305 = vld [vmem:[#allocation8 + $0xa0] sm:$0xff]
        %v2306 = vld [vmem:[#allocation8 + $0xa8] sm:$0xff]
        %v2307 = vld [vmem:[#allocation8 + $0xb0] sm:$0xff]
        %v2308 = vld [vmem:[#allocation8 + $0xb8] sm:$0xff]
        %v2309 = vld [vmem:[#allocation8 + $0xc0] sm:$0xff]
        %v2310 = vld [vmem:[#allocation8 + $0xc8] sm:$0xff]
        %v2311 = vld [vmem:[#allocation8 + $0xd0] sm:$0xff]
        %v2312 = vld [vmem:[#allocation8 + $0xd8] sm:$0xff]
        %v2313 = vld [vmem:[#allocation8 + $0xe0] sm:$0xff]
        %v2314 = vld [vmem:[#allocation8 + $0xe8] sm:$0xff]
        %v2315 = vld [vmem:[#allocation8 + $0xf0] sm:$0xff]
        %v2316 = vld [vmem:[#allocation8 + $0xf8] sm:$0xff]
        %v2317 = vld [vmem:[#allocation8 + $0x100] sm:$0xff]
        %v2318 = vld [vmem:[#allocation8 + $0x108] sm:$0xff]
        %v2319 = vld [vmem:[#allocation8 + $0x110] sm:$0xff]
        %v2320 = vld [vmem:[#allocation8 + $0x118] sm:$0xff]
        %v2321 = vld [vmem:[#allocation8 + $0x120] sm:$0xff]
        %v2322 = vld [vmem:[#allocation8 + $0x128] sm:$0xff]
        %v2323 = vld [vmem:[#allocation8 + $0x130] sm:$0xff]
        %v2324 = vld [vmem:[#allocation8 + $0x138] sm:$0xff]
        %v2325 = vld [vmem:[#allocation8 + $0x140] sm:$0xff]
        %v2326 = vld [vmem:[#allocation8 + $0x148] sm:$0xff]
        %v2327 = vld [vmem:[#allocation8 + $0x150] sm:$0xff]
        %v2328 = vld [vmem:[#allocation8 + $0x158] sm:$0xff]
        %v2329 = vld [vmem:[#allocation8 + $0x160] sm:$0xff]
        %v2330 = vld [vmem:[#allocation8 + $0x168] sm:$0xff]
        %v2331 = vld [vmem:[#allocation8 + $0x170] sm:$0xff]
        %v2332 = vld [vmem:[#allocation8 + $0x178] sm:$0xff]
        %v2333 = vld [vmem:[#allocation8 + $0x180] sm:$0xff]
        %v2334 = vld [vmem:[#allocation8 + $0x188] sm:$0xff]
        %v2335 = vld [vmem:[#allocation8 + $0x190] sm:$0xff]
        %v2336 = vld [vmem:[#allocation8 + $0x198] sm:$0xff]
        %v2337 = vld [vmem:[#allocation8 + $0x1a0] sm:$0xff]
        %v2338 = vld [vmem:[#allocation8 + $0x1a8] sm:$0xff]
        %v2339 = vld [vmem:[#allocation8 + $0x1b0] sm:$0xff]
        %v2340 = vld [vmem:[#allocation8 + $0x1b8] sm:$0xff]
        %v2341 = vld [vmem:[#allocation8 + $0x1c0] sm:$0xff]
        %v2342 = vld [vmem:[#allocation8 + $0x1c8] sm:$0xff]
        %v2343 = vld [vmem:[#allocation8 + $0x1d0] sm:$0xff]
        %v2344 = vld [vmem:[#allocation8 + $0x1d8] sm:$0xff]
        %v2345 = vld [vmem:[#allocation8 + $0x1e0] sm:$0xff]
        %v2346 = vld [vmem:[#allocation8 + $0x1e8] sm:$0xff]
        %v2347 = vld [vmem:[#allocation8 + $0x1f0] sm:$0xff]
        %v2348 = vld [vmem:[#allocation8 + $0x1f8] sm:$0xff]
        %v2349 = vld [vmem:[#allocation8 + $0x200] sm:$0xff]
        %v2350 = vld [vmem:[#allocation8 + $0x208] sm:$0xff]
        %v2351 = vld [vmem:[#allocation8 + $0x210] sm:$0xff]
        %v2352 = vld [vmem:[#allocation8 + $0x218] sm:$0xff]
        %v2353 = vld [vmem:[#allocation8 + $0x220] sm:$0xff]
        %v2354 = vld [vmem:[#allocation8 + $0x228] sm:$0xff]
        %v2355 = vld [vmem:[#allocation8 + $0x230] sm:$0xff]
        %v2356 = vld [vmem:[#allocation8 + $0x238] sm:$0xff]
        %v2357 = vld [vmem:[#allocation8 + $0x240] sm:$0xff]
        %v2358 = vld [vmem:[#allocation8 + $0x248] sm:$0xff]
        %v2359 = vld [vmem:[#allocation8 + $0x250] sm:$0xff]
        %v2360 = vld [vmem:[#allocation8 + $0x258] sm:$0xff]
        %v2361 = vld [vmem:[#allocation8 + $0x260] sm:$0xff]
        %v2362 = vld [vmem:[#allocation8 + $0x268] sm:$0xff]
        %v2363 = vld [vmem:[#allocation8 + $0x270] sm:$0xff]
        %v2364 = vld [vmem:[#allocation8 + $0x278] sm:$0xff]
        %v2365 = vld [vmem:[#allocation8 + $0x280] sm:$0xff]
        %v2366 = vld [vmem:[#allocation8 + $0x288] sm:$0xff]
        %v2367 = vld [vmem:[#allocation8 + $0x290] sm:$0xff]
        %v2368 = vld [vmem:[#allocation8 + $0x298] sm:$0xff]
        %v2369 = vld [vmem:[#allocation8 + $0x2a0] sm:$0xff]
        %v2370 = vld [vmem:[#allocation8 + $0x2a8] sm:$0xff]
        %v2371 = vld [vmem:[#allocation8 + $0x2b0] sm:$0xff]
        %v2372 = vld [vmem:[#allocation8 + $0x2b8] sm:$0xff]
        %v2373 = vld [vmem:[#allocation8 + $0x2c0] sm:$0xff]
        %v2374 = vld [vmem:[#allocation8 + $0x2c8] sm:$0xff]
        %v2375 = vld [vmem:[#allocation8 + $0x2d0] sm:$0xff]
        %v2376 = vld [vmem:[#allocation8 + $0x2d8] sm:$0xff]
        %v2377 = vld [vmem:[#allocation8 + $0x2e0] sm:$0xff]
        %v2378 = vld [vmem:[#allocation8 + $0x2e8] sm:$0xff]
        %v2379 = vld [vmem:[#allocation8 + $0x2f0] sm:$0xff]
        %v2380 = vld [vmem:[#allocation8 + $0x2f8] sm:$0xff]
        %v2381 = vld [vmem:[#allocation8 + $0x300] sm:$0xff]
        %v2382 = vld [vmem:[#allocation8 + $0x308] sm:$0xff]
        %v2383 = vld [vmem:[#allocation8 + $0x310] sm:$0xff]
        %v2384 = vld [vmem:[#allocation8 + $0x318] sm:$0xff]
        %v2385 = vld [vmem:[#allocation8 + $0x320] sm:$0xff]
        %v2386 = vld [vmem:[#allocation8 + $0x328] sm:$0xff]
        %v2387 = vld [vmem:[#allocation8 + $0x330] sm:$0xff]
        %v2388 = vld [vmem:[#allocation8 + $0x338] sm:$0xff]
        %v2389 = vld [vmem:[#allocation8 + $0x340] sm:$0xff]
        %v2390 = vld [vmem:[#allocation8 + $0x348] sm:$0xff]
        %v2391 = vld [vmem:[#allocation8 + $0x350] sm:$0xff]
        %v2392 = vld [vmem:[#allocation8 + $0x358] sm:$0xff]
        %v2393 = vld [vmem:[#allocation8 + $0x360] sm:$0xff]
        %v2394 = vld [vmem:[#allocation8 + $0x368] sm:$0xff]
        %v2395 = vld [vmem:[#allocation8 + $0x370] sm:$0xff]
        %v2396 = vld [vmem:[#allocation8 + $0x378] sm:$0xff]
        %v2397 = vld [vmem:[#allocation8 + $0x380] sm:$0xff]
        %v2398 = vld [vmem:[#allocation8 + $0x388] sm:$0xff]
        %v2399 = vld [vmem:[#allocation8 + $0x390] sm:$0xff]
        %v2400 = vld [vmem:[#allocation8 + $0x398] sm:$0xff]
        %v2401 = vld [vmem:[#allocation8 + $0x3a0] sm:$0xff]
        %v2402 = vld [vmem:[#allocation8 + $0x3a8] sm:$0xff]
        %v2403 = vld [vmem:[#allocation8 + $0x3b0] sm:$0xff]
        %v2404 = vld [vmem:[#allocation8 + $0x3b8] sm:$0xff]
        %v2405 = vld [vmem:[#allocation8 + $0x3c0] sm:$0xff]
        %v2406 = vld [vmem:[#allocation8 + $0x3c8] sm:$0xff]
        %v2407 = vld [vmem:[#allocation8 + $0x3d0] sm:$0xff]
        %v2408 = vld [vmem:[#allocation8 + $0x3d8] sm:$0xff]
        %v2409 = vld [vmem:[#allocation8 + $0x3e0] sm:$0xff]
        %v2410 = vld [vmem:[#allocation8 + $0x3e8] sm:$0xff]
        %v2411 = vld [vmem:[#allocation8 + $0x3f0] sm:$0xff]
        %v2412 = vld [vmem:[#allocation8 + $0x3f8] sm:$0xff]
        %v2541 = vunpack.c.l.b16 %v2285
        %v2542 = vunpack.c.h.b16 %v2285
        %v2543 = vunpack.c.l.b16 %v2286
        %v2544 = vunpack.c.h.b16 %v2286
        %v2545 = vunpack.c.l.b16 %v2287
        %v2546 = vunpack.c.h.b16 %v2287
        %v2547 = vunpack.c.l.b16 %v2288
        %v2548 = vunpack.c.h.b16 %v2288
        %v2549 = vunpack.c.l.b16 %v2289
        %v2550 = vunpack.c.h.b16 %v2289
        %v2551 = vunpack.c.l.b16 %v2290
        %v2552 = vunpack.c.h.b16 %v2290
        %v2553 = vunpack.c.l.b16 %v2291
        %v2554 = vunpack.c.h.b16 %v2291
        %v2555 = vunpack.c.l.b16 %v2292
        %v2556 = vunpack.c.h.b16 %v2292
        %v2557 = vunpack.c.l.b16 %v2293
        %v2558 = vunpack.c.h.b16 %v2293
        %v2559 = vunpack.c.l.b16 %v2294
        %v2560 = vunpack.c.h.b16 %v2294
        %v2561 = vunpack.c.l.b16 %v2295
        %v2562 = vunpack.c.h.b16 %v2295
        %v2563 = vunpack.c.l.b16 %v2296
        %v2564 = vunpack.c.h.b16 %v2296
        %v2565 = vunpack.c.l.b16 %v2297
        %v2566 = vunpack.c.h.b16 %v2297
        %v2567 = vunpack.c.l.b16 %v2298
        %v2568 = vunpack.c.h.b16 %v2298
        %v2569 = vunpack.c.l.b16 %v2299
        %v2570 = vunpack.c.h.b16 %v2299
        %v2571 = vunpack.c.l.b16 %v2300
        %v2572 = vunpack.c.h.b16 %v2300
        %v2573 = vunpack.c.l.b16 %v2301
        %v2574 = vunpack.c.h.b16 %v2301
        %v2575 = vunpack.c.l.b16 %v2302
        %v2576 = vunpack.c.h.b16 %v2302
        %v2577 = vunpack.c.l.b16 %v2303
        %v2578 = vunpack.c.h.b16 %v2303
        %v2579 = vunpack.c.l.b16 %v2304
        %v2580 = vunpack.c.h.b16 %v2304
        %v2581 = vunpack.c.l.b16 %v2305
        %v2582 = vunpack.c.h.b16 %v2305
        %v2583 = vunpack.c.l.b16 %v2306
        %v2584 = vunpack.c.h.b16 %v2306
        %v2585 = vunpack.c.l.b16 %v2307
        %v2586 = vunpack.c.h.b16 %v2307
        %v2587 = vunpack.c.l.b16 %v2308
        %v2588 = vunpack.c.h.b16 %v2308
        %v2589 = vunpack.c.l.b16 %v2309
        %v2590 = vunpack.c.h.b16 %v2309
        %v2591 = vunpack.c.l.b16 %v2310
        %v2592 = vunpack.c.h.b16 %v2310
        %v2593 = vunpack.c.l.b16 %v2311
        %v2594 = vunpack.c.h.b16 %v2311
        %v2595 = vunpack.c.l.b16 %v2312
        %v2596 = vunpack.c.h.b16 %v2312
        %v2597 = vunpack.c.l.b16 %v2313
        %v2598 = vunpack.c.h.b16 %v2313
        %v2599 = vunpack.c.l.b16 %v2314
        %v2600 = vunpack.c.h.b16 %v2314
        %v2601 = vunpack.c.l.b16 %v2315
        %v2602 = vunpack.c.h.b16 %v2315
        %v2603 = vunpack.c.l.b16 %v2316
        %v2604 = vunpack.c.h.b16 %v2316
        %v2605 = vunpack.c.l.b16 %v2317
        %v2606 = vunpack.c.h.b16 %v2317
        %v2607 = vunpack.c.l.b16 %v2318
        %v2608 = vunpack.c.h.b16 %v2318
        %v2609 = vunpack.c.l.b16 %v2319
        %v2610 = vunpack.c.h.b16 %v2319
        %v2611 = vunpack.c.l.b16 %v2320
        %v2612 = vunpack.c.h.b16 %v2320
        %v2613 = vunpack.c.l.b16 %v2321
        %v2614 = vunpack.c.h.b16 %v2321
        %v2615 = vunpack.c.l.b16 %v2322
        %v2616 = vunpack.c.h.b16 %v2322
        %v2617 = vunpack.c.l.b16 %v2323
        %v2618 = vunpack.c.h.b16 %v2323
        %v2619 = vunpack.c.l.b16 %v2324
        %v2620 = vunpack.c.h.b16 %v2324
        %v2621 = vunpack.c.l.b16 %v2325
        %v2622 = vunpack.c.h.b16 %v2325
        %v2623 = vunpack.c.l.b16 %v2326
        %v2624 = vunpack.c.h.b16 %v2326
        %v2625 = vunpack.c.l.b16 %v2327
        %v2626 = vunpack.c.h.b16 %v2327
        %v2627 = vunpack.c.l.b16 %v2328
        %v2628 = vunpack.c.h.b16 %v2328
        %v2629 = vunpack.c.l.b16 %v2329
        %v2630 = vunpack.c.h.b16 %v2329
        %v2631 = vunpack.c.l.b16 %v2330
        %v2632 = vunpack.c.h.b16 %v2330
        %v2633 = vunpack.c.l.b16 %v2331
        %v2634 = vunpack.c.h.b16 %v2331
        %v2635 = vunpack.c.l.b16 %v2332
        %v2636 = vunpack.c.h.b16 %v2332
        %v2637 = vunpack.c.l.b16 %v2333
        %v2638 = vunpack.c.h.b16 %v2333
        %v2639 = vunpack.c.l.b16 %v2334
        %v2640 = vunpack.c.h.b16 %v2334
        %v2641 = vunpack.c.l.b16 %v2335
        %v2642 = vunpack.c.h.b16 %v2335
        %v2643 = vunpack.c.l.b16 %v2336
        %v2644 = vunpack.c.h.b16 %v2336
        %v2645 = vunpack.c.l.b16 %v2337
        %v2646 = vunpack.c.h.b16 %v2337
        %v2647 = vunpack.c.l.b16 %v2338
        %v2648 = vunpack.c.h.b16 %v2338
        %v2649 = vunpack.c.l.b16 %v2339
        %v2650 = vunpack.c.h.b16 %v2339
        %v2651 = vunpack.c.l.b16 %v2340
        %v2652 = vunpack.c.h.b16 %v2340
        %v2653 = vunpack.c.l.b16 %v2341
        %v2654 = vunpack.c.h.b16 %v2341
        %v2655 = vunpack.c.l.b16 %v2342
        %v2656 = vunpack.c.h.b16 %v2342
        %v2657 = vunpack.c.l.b16 %v2343
        %v2658 = vunpack.c.h.b16 %v2343
        %v2659 = vunpack.c.l.b16 %v2344
        %v2660 = vunpack.c.h.b16 %v2344
        %v2661 = vunpack.c.l.b16 %v2345
        %v2662 = vunpack.c.h.b16 %v2345
        %v2663 = vunpack.c.l.b16 %v2346
        %v2664 = vunpack.c.h.b16 %v2346
        %v2665 = vunpack.c.l.b16 %v2347
        %v2666 = vunpack.c.h.b16 %v2347
        %v2667 = vunpack.c.l.b16 %v2348
        %v2668 = vunpack.c.h.b16 %v2348
        %v2669 = vunpack.c.l.b16 %v2349
        %v2670 = vunpack.c.h.b16 %v2349
        %v2671 = vunpack.c.l.b16 %v2350
        %v2672 = vunpack.c.h.b16 %v2350
        %v2673 = vunpack.c.l.b16 %v2351
        %v2674 = vunpack.c.h.b16 %v2351
        %v2675 = vunpack.c.l.b16 %v2352
        %v2676 = vunpack.c.h.b16 %v2352
        %v2677 = vunpack.c.l.b16 %v2353
        %v2678 = vunpack.c.h.b16 %v2353
        %v2679 = vunpack.c.l.b16 %v2354
        %v2680 = vunpack.c.h.b16 %v2354
        %v2681 = vunpack.c.l.b16 %v2355
        %v2682 = vunpack.c.h.b16 %v2355
        %v2683 = vunpack.c.l.b16 %v2356
        %v2684 = vunpack.c.h.b16 %v2356
        %v2685 = vunpack.c.l.b16 %v2357
        %v2686 = vunpack.c.h.b16 %v2357
        %v2687 = vunpack.c.l.b16 %v2358
        %v2688 = vunpack.c.h.b16 %v2358
        %v2689 = vunpack.c.l.b16 %v2359
        %v2690 = vunpack.c.h.b16 %v2359
        %v2691 = vunpack.c.l.b16 %v2360
        %v2692 = vunpack.c.h.b16 %v2360
        %v2693 = vunpack.c.l.b16 %v2361
        %v2694 = vunpack.c.h.b16 %v2361
        %v2695 = vunpack.c.l.b16 %v2362
        %v2696 = vunpack.c.h.b16 %v2362
        %v2697 = vunpack.c.l.b16 %v2363
        %v2698 = vunpack.c.h.b16 %v2363
        %v2699 = vunpack.c.l.b16 %v2364
        %v2700 = vunpack.c.h.b16 %v2364
        %v2701 = vunpack.c.l.b16 %v2365
        %v2702 = vunpack.c.h.b16 %v2365
        %v2703 = vunpack.c.l.b16 %v2366
        %v2704 = vunpack.c.h.b16 %v2366
        %v2705 = vunpack.c.l.b16 %v2367
        %v2706 = vunpack.c.h.b16 %v2367
        %v2707 = vunpack.c.l.b16 %v2368
        %v2708 = vunpack.c.h.b16 %v2368
        %v2709 = vunpack.c.l.b16 %v2369
        %v2710 = vunpack.c.h.b16 %v2369
        %v2711 = vunpack.c.l.b16 %v2370
        %v2712 = vunpack.c.h.b16 %v2370
        %v2713 = vunpack.c.l.b16 %v2371
        %v2714 = vunpack.c.h.b16 %v2371
        %v2715 = vunpack.c.l.b16 %v2372
        %v2716 = vunpack.c.h.b16 %v2372
        %v2717 = vunpack.c.l.b16 %v2373
        %v2718 = vunpack.c.h.b16 %v2373
        %v2719 = vunpack.c.l.b16 %v2374
        %v2720 = vunpack.c.h.b16 %v2374
        %v2721 = vunpack.c.l.b16 %v2375
        %v2722 = vunpack.c.h.b16 %v2375
        %v2723 = vunpack.c.l.b16 %v2376
        %v2724 = vunpack.c.h.b16 %v2376
        %v2725 = vunpack.c.l.b16 %v2377
        %v2726 = vunpack.c.h.b16 %v2377
        %v2727 = vunpack.c.l.b16 %v2378
        %v2728 = vunpack.c.h.b16 %v2378
        %v2729 = vunpack.c.l.b16 %v2379
        %v2730 = vunpack.c.h.b16 %v2379
        %v2731 = vunpack.c.l.b16 %v2380
        %v2732 = vunpack.c.h.b16 %v2380
        %v2733 = vunpack.c.l.b16 %v2381
        %v2734 = vunpack.c.h.b16 %v2381
        %v2735 = vunpack.c.l.b16 %v2382
        %v2736 = vunpack.c.h.b16 %v2382
        %v2737 = vunpack.c.l.b16 %v2383
        %v2738 = vunpack.c.h.b16 %v2383
        %v2739 = vunpack.c.l.b16 %v2384
        %v2740 = vunpack.c.h.b16 %v2384
        %v2741 = vunpack.c.l.b16 %v2385
        %v2742 = vunpack.c.h.b16 %v2385
        %v2743 = vunpack.c.l.b16 %v2386
        %v2744 = vunpack.c.h.b16 %v2386
        %v2745 = vunpack.c.l.b16 %v2387
        %v2746 = vunpack.c.h.b16 %v2387
        %v2747 = vunpack.c.l.b16 %v2388
        %v2748 = vunpack.c.h.b16 %v2388
        %v2749 = vunpack.c.l.b16 %v2389
        %v2750 = vunpack.c.h.b16 %v2389
        %v2751 = vunpack.c.l.b16 %v2390
        %v2752 = vunpack.c.h.b16 %v2390
        %v2753 = vunpack.c.l.b16 %v2391
        %v2754 = vunpack.c.h.b16 %v2391
        %v2755 = vunpack.c.l.b16 %v2392
        %v2756 = vunpack.c.h.b16 %v2392
        %v2757 = vunpack.c.l.b16 %v2393
        %v2758 = vunpack.c.h.b16 %v2393
        %v2759 = vunpack.c.l.b16 %v2394
        %v2760 = vunpack.c.h.b16 %v2394
        %v2761 = vunpack.c.l.b16 %v2395
        %v2762 = vunpack.c.h.b16 %v2395
        %v2763 = vunpack.c.l.b16 %v2396
        %v2764 = vunpack.c.h.b16 %v2396
        %v2765 = vunpack.c.l.b16 %v2397
        %v2766 = vunpack.c.h.b16 %v2397
        %v2767 = vunpack.c.l.b16 %v2398
        %v2768 = vunpack.c.h.b16 %v2398
        %v2769 = vunpack.c.l.b16 %v2399
        %v2770 = vunpack.c.h.b16 %v2399
        %v2771 = vunpack.c.l.b16 %v2400
        %v2772 = vunpack.c.h.b16 %v2400
        %v2773 = vunpack.c.l.b16 %v2401
        %v2774 = vunpack.c.h.b16 %v2401
        %v2775 = vunpack.c.l.b16 %v2402
        %v2776 = vunpack.c.h.b16 %v2402
        %v2777 = vunpack.c.l.b16 %v2403
        %v2778 = vunpack.c.h.b16 %v2403
        %v2779 = vunpack.c.l.b16 %v2404
        %v2780 = vunpack.c.h.b16 %v2404
        %v2781 = vunpack.c.l.b16 %v2405
        %v2782 = vunpack.c.h.b16 %v2405
        %v2783 = vunpack.c.l.b16 %v2406
        %v2784 = vunpack.c.h.b16 %v2406
        %v2785 = vunpack.c.l.b16 %v2407
        %v2786 = vunpack.c.h.b16 %v2407
        %v2787 = vunpack.c.l.b16 %v2408
        %v2788 = vunpack.c.h.b16 %v2408
        %v2789 = vunpack.c.l.b16 %v2409
        %v2790 = vunpack.c.h.b16 %v2409
        %v2791 = vunpack.c.l.b16 %v2410
        %v2792 = vunpack.c.h.b16 %v2410
        %v2793 = vunpack.c.l.b16 %v2411
        %v2794 = vunpack.c.h.b16 %v2411
        %v2795 = vunpack.c.l.b16 %v2412
        %v2796 = vunpack.c.h.b16 %v2412
        %v2797 = vpack.c.b16 %v2545, %v2541
        %v2798 = vpack.c.b16 %v2546, %v2542
        %v2799 = vpack.c.b16 %v2547, %v2543
        %v2800 = vpack.c.b16 %v2548, %v2544
        %v2801 = vpack.c.b16 %v2553, %v2549
        %v2802 = vpack.c.b16 %v2554, %v2550
        %v2803 = vpack.c.b16 %v2555, %v2551
        %v2804 = vpack.c.b16 %v2556, %v2552
        %v2805 = vpack.c.b16 %v2561, %v2557
        %v2806 = vpack.c.b16 %v2562, %v2558
        %v2807 = vpack.c.b16 %v2563, %v2559
        %v2808 = vpack.c.b16 %v2564, %v2560
        %v2809 = vpack.c.b16 %v2569, %v2565
        %v2810 = vpack.c.b16 %v2570, %v2566
        %v2811 = vpack.c.b16 %v2571, %v2567
        %v2812 = vpack.c.b16 %v2572, %v2568
        %v2813 = vpack.c.b16 %v2577, %v2573
        %v2814 = vpack.c.b16 %v2578, %v2574
        %v2815 = vpack.c.b16 %v2579, %v2575
        %v2816 = vpack.c.b16 %v2580, %v2576
        %v2817 = vpack.c.b16 %v2585, %v2581
        %v2818 = vpack.c.b16 %v2586, %v2582
        %v2819 = vpack.c.b16 %v2587, %v2583
        %v2820 = vpack.c.b16 %v2588, %v2584
        %v2821 = vpack.c.b16 %v2593, %v2589
        %v2822 = vpack.c.b16 %v2594, %v2590
        %v2823 = vpack.c.b16 %v2595, %v2591
        %v2824 = vpack.c.b16 %v2596, %v2592
        %v2825 = vpack.c.b16 %v2601, %v2597
        %v2826 = vpack.c.b16 %v2602, %v2598
        %v2827 = vpack.c.b16 %v2603, %v2599
        %v2828 = vpack.c.b16 %v2604, %v2600
        %v2829 = vpack.c.b16 %v2609, %v2605
        %v2830 = vpack.c.b16 %v2610, %v2606
        %v2831 = vpack.c.b16 %v2611, %v2607
        %v2832 = vpack.c.b16 %v2612, %v2608
        %v2833 = vpack.c.b16 %v2617, %v2613
        %v2834 = vpack.c.b16 %v2618, %v2614
        %v2835 = vpack.c.b16 %v2619, %v2615
        %v2836 = vpack.c.b16 %v2620, %v2616
        %v2837 = vpack.c.b16 %v2625, %v2621
        %v2838 = vpack.c.b16 %v2626, %v2622
        %v2839 = vpack.c.b16 %v2627, %v2623
        %v2840 = vpack.c.b16 %v2628, %v2624
        %v2841 = vpack.c.b16 %v2633, %v2629
        %v2842 = vpack.c.b16 %v2634, %v2630
        %v2843 = vpack.c.b16 %v2635, %v2631
        %v2844 = vpack.c.b16 %v2636, %v2632
        %v2845 = vpack.c.b16 %v2641, %v2637
        %v2846 = vpack.c.b16 %v2642, %v2638
        %v2847 = vpack.c.b16 %v2643, %v2639
        %v2848 = vpack.c.b16 %v2644, %v2640
        %v2849 = vpack.c.b16 %v2649, %v2645
        %v2850 = vpack.c.b16 %v2650, %v2646
        %v2851 = vpack.c.b16 %v2651, %v2647
        %v2852 = vpack.c.b16 %v2652, %v2648
        %v2853 = vpack.c.b16 %v2657, %v2653
        %v2854 = vpack.c.b16 %v2658, %v2654
        %v2855 = vpack.c.b16 %v2659, %v2655
        %v2856 = vpack.c.b16 %v2660, %v2656
        %v2857 = vpack.c.b16 %v2665, %v2661
        %v2858 = vpack.c.b16 %v2666, %v2662
        %v2859 = vpack.c.b16 %v2667, %v2663
        %v2860 = vpack.c.b16 %v2668, %v2664
        %v2861 = vpack.c.b16 %v2673, %v2669
        %v2862 = vpack.c.b16 %v2674, %v2670
        %v2863 = vpack.c.b16 %v2675, %v2671
        %v2864 = vpack.c.b16 %v2676, %v2672
        %v2865 = vpack.c.b16 %v2681, %v2677
        %v2866 = vpack.c.b16 %v2682, %v2678
        %v2867 = vpack.c.b16 %v2683, %v2679
        %v2868 = vpack.c.b16 %v2684, %v2680
        %v2869 = vpack.c.b16 %v2689, %v2685
        %v2870 = vpack.c.b16 %v2690, %v2686
        %v2871 = vpack.c.b16 %v2691, %v2687
        %v2872 = vpack.c.b16 %v2692, %v2688
        %v2873 = vpack.c.b16 %v2697, %v2693
        %v2874 = vpack.c.b16 %v2698, %v2694
        %v2875 = vpack.c.b16 %v2699, %v2695
        %v2876 = vpack.c.b16 %v2700, %v2696
        %v2877 = vpack.c.b16 %v2705, %v2701
        %v2878 = vpack.c.b16 %v2706, %v2702
        %v2879 = vpack.c.b16 %v2707, %v2703
        %v2880 = vpack.c.b16 %v2708, %v2704
        %v2881 = vpack.c.b16 %v2713, %v2709
        %v2882 = vpack.c.b16 %v2714, %v2710
        %v2883 = vpack.c.b16 %v2715, %v2711
        %v2884 = vpack.c.b16 %v2716, %v2712
        %v2885 = vpack.c.b16 %v2721, %v2717
        %v2886 = vpack.c.b16 %v2722, %v2718
        %v2887 = vpack.c.b16 %v2723, %v2719
        %v2888 = vpack.c.b16 %v2724, %v2720
        %v2889 = vpack.c.b16 %v2729, %v2725
        %v2890 = vpack.c.b16 %v2730, %v2726
        %v2891 = vpack.c.b16 %v2731, %v2727
        %v2892 = vpack.c.b16 %v2732, %v2728
        %v2893 = vpack.c.b16 %v2737, %v2733
        %v2894 = vpack.c.b16 %v2738, %v2734
        %v2895 = vpack.c.b16 %v2739, %v2735
        %v2896 = vpack.c.b16 %v2740, %v2736
        %v2897 = vpack.c.b16 %v2745, %v2741
        %v2898 = vpack.c.b16 %v2746, %v2742
        %v2899 = vpack.c.b16 %v2747, %v2743
        %v2900 = vpack.c.b16 %v2748, %v2744
        %v2901 = vpack.c.b16 %v2753, %v2749
        %v2902 = vpack.c.b16 %v2754, %v2750
        %v2903 = vpack.c.b16 %v2755, %v2751
        %v2904 = vpack.c.b16 %v2756, %v2752
        %v2905 = vpack.c.b16 %v2761, %v2757
        %v2906 = vpack.c.b16 %v2762, %v2758
        %v2907 = vpack.c.b16 %v2763, %v2759
        %v2908 = vpack.c.b16 %v2764, %v2760
        %v2909 = vpack.c.b16 %v2769, %v2765
        %v2910 = vpack.c.b16 %v2770, %v2766
        %v2911 = vpack.c.b16 %v2771, %v2767
        %v2912 = vpack.c.b16 %v2772, %v2768
        %v2913 = vpack.c.b16 %v2777, %v2773
        %v2914 = vpack.c.b16 %v2778, %v2774
        %v2915 = vpack.c.b16 %v2779, %v2775
        %v2916 = vpack.c.b16 %v2780, %v2776
        %v2917 = vpack.c.b16 %v2785, %v2781
        %v2918 = vpack.c.b16 %v2786, %v2782
        %v2919 = vpack.c.b16 %v2787, %v2783
        %v2920 = vpack.c.b16 %v2788, %v2784
        %v2921 = vpack.c.b16 %v2793, %v2789
        %v2922 = vpack.c.b16 %v2794, %v2790
        %v2923 = vpack.c.b16 %v2795, %v2791
        %v2924 = vpack.c.b16 %v2796, %v2792
        %3053 = vmatprep.subr.bf16.mxu0 %v2798
        %3054 = vmatpush1.bf16.msra.mxu0 %v2797
        %3055 = vmatprep.subr.bf16.mxu0 %v2802
        %3056 = vmatpush1.bf16.msra.mxu0 %v2801
        %3057 = vmatprep.subr.bf16.mxu0 %v2806
        %3058 = vmatpush1.bf16.msra.mxu0 %v2805
        %3059 = vmatprep.subr.bf16.mxu0 %v2810
        %3060 = vmatpush1.bf16.msra.mxu0 %v2809
        %3061 = vmatprep.subr.bf16.mxu0 %v2814
        %3062 = vmatpush1.bf16.msra.mxu0 %v2813
        %3063 = vmatprep.subr.bf16.mxu0 %v2818
        %3064 = vmatpush1.bf16.msra.mxu0 %v2817
        %3065 = vmatprep.subr.bf16.mxu0 %v2822
        %3066 = vmatpush1.bf16.msra.mxu0 %v2821
        %3067 = vmatprep.subr.bf16.mxu0 %v2826
        %3068 = vmatpush1.bf16.msra.mxu0 %v2825
        %3069 = vmatprep.subr.bf16.mxu0 %v2830
        %3070 = vmatpush1.bf16.msra.mxu0 %v2829
        %3071 = vmatprep.subr.bf16.mxu0 %v2834
        %3072 = vmatpush1.bf16.msra.mxu0 %v2833
        %3073 = vmatprep.subr.bf16.mxu0 %v2838
        %3074 = vmatpush1.bf16.msra.mxu0 %v2837
        %3075 = vmatprep.subr.bf16.mxu0 %v2842
        %3076 = vmatpush1.bf16.msra.mxu0 %v2841
        %3077 = vmatprep.subr.bf16.mxu0 %v2846
        %3078 = vmatpush1.bf16.msra.mxu0 %v2845
        %3079 = vmatprep.subr.bf16.mxu0 %v2850
        %3080 = vmatpush1.bf16.msra.mxu0 %v2849
        %3081 = vmatprep.subr.bf16.mxu0 %v2854
        %3082 = vmatpush1.bf16.msra.mxu0 %v2853
        %3083 = vmatprep.subr.bf16.mxu0 %v2858
        %3084 = vmatpush1.bf16.msra.mxu0 %v2857
        %3085 = vmatprep.mubr.bf16.mxu0 %v2282
        %3086 = vmatmul.mubr.bf16.gmra.mrb[0].mxu0 %v2281
        %v3087 = vpop.f32.mrb[0].mxu0
        %v3088 = vadd.f32 0.0, %v3087
        %v3089 = vpop.f32.mrb[0].mxu0
        %v3090 = vadd.f32 0.0, %v3089
        %v3091 = vpop.f32.mrb[0].mxu0
        %v3092 = vpop.f32.mrb[0].mxu0
        %3093 = vdwg.mxu0
        %3094 = vmatprep.subr.bf16.mxu0 %v2862
        %3095 = vmatpush1.bf16.msra.mxu0 %v2861
        %3096 = vmatprep.subr.bf16.mxu0 %v2866
        %3097 = vmatpush1.bf16.msra.mxu0 %v2865
        %3098 = vmatprep.subr.bf16.mxu0 %v2870
        %3099 = vmatpush1.bf16.msra.mxu0 %v2869
        %3100 = vmatprep.subr.bf16.mxu0 %v2874
        %3101 = vmatpush1.bf16.msra.mxu0 %v2873
        %3102 = vmatprep.subr.bf16.mxu0 %v2878
        %3103 = vmatpush1.bf16.msra.mxu0 %v2877
        %3104 = vmatprep.subr.bf16.mxu0 %v2882
        %3105 = vmatpush1.bf16.msra.mxu0 %v2881
        %3106 = vmatprep.subr.bf16.mxu0 %v2886
        %3107 = vmatpush1.bf16.msra.mxu0 %v2885
        %3108 = vmatprep.subr.bf16.mxu0 %v2890
        %3109 = vmatpush1.bf16.msra.mxu0 %v2889
        %3110 = vmatprep.subr.bf16.mxu0 %v2894
        %3111 = vmatpush1.bf16.msra.mxu0 %v2893
        %3112 = vmatprep.subr.bf16.mxu0 %v2898
        %3113 = vmatpush1.bf16.msra.mxu0 %v2897
        %3114 = vmatprep.subr.bf16.mxu0 %v2902
        %3115 = vmatpush1.bf16.msra.mxu0 %v2901
        %3116 = vmatprep.subr.bf16.mxu0 %v2906
        %3117 = vmatpush1.bf16.msra.mxu0 %v2905
        %3118 = vmatprep.subr.bf16.mxu0 %v2910
        %3119 = vmatpush1.bf16.msra.mxu0 %v2909
        %3120 = vmatprep.subr.bf16.mxu0 %v2914
        %3121 = vmatpush1.bf16.msra.mxu0 %v2913
        %3122 = vmatprep.subr.bf16.mxu0 %v2918
        %3123 = vmatpush1.bf16.msra.mxu0 %v2917
        %3124 = vmatprep.subr.bf16.mxu0 %v2922
        %3125 = vmatpush1.bf16.msra.mxu0 %v2921
        %3126 = vmatprep.mubr.bf16.mxu0 %v2284
        %3127 = vmatmul.mubr.bf16.gmra.mrb[0].mxu0 %v2283
        %v3128 = vpop.f32.mrb[0].mxu0
        %v3129 = vadd.f32 %v3088, %v3128
        %v3130 = vpop.f32.mrb[0].mxu0
        %v3131 = vadd.f32 %v3090, %v3130
        %v3132 = vpop.f32.mrb[0].mxu0
        %v3133 = vpop.f32.mrb[0].mxu0
        %3134 = vdwg.mxu0
        %3135 = vmatprep.subr.bf16.mxu0 %v2800
        %3136 = vmatpush1.bf16.msra.mxu0 %v2799
        %3137 = vmatprep.subr.bf16.mxu0 %v2804
        %3138 = vmatpush1.bf16.msra.mxu0 %v2803
        %3139 = vmatprep.subr.bf16.mxu0 %v2808
        %3140 = vmatpush1.bf16.msra.mxu0 %v2807
        %3141 = vmatprep.subr.bf16.mxu0 %v2812
        %3142 = vmatpush1.bf16.msra.mxu0 %v2811
        %3143 = vmatprep.subr.bf16.mxu0 %v2816
        %3144 = vmatpush1.bf16.msra.mxu0 %v2815
        %3145 = vmatprep.subr.bf16.mxu0 %v2820
        %3146 = vmatpush1.bf16.msra.mxu0 %v2819
        %3147 = vmatprep.subr.bf16.mxu0 %v2824
        %3148 = vmatpush1.bf16.msra.mxu0 %v2823
        %3149 = vmatprep.subr.bf16.mxu0 %v2828
        %3150 = vmatpush1.bf16.msra.mxu0 %v2827
        %3151 = vmatprep.subr.bf16.mxu0 %v2832
        %3152 = vmatpush1.bf16.msra.mxu0 %v2831
        %3153 = vmatprep.subr.bf16.mxu0 %v2836
        %3154 = vmatpush1.bf16.msra.mxu0 %v2835
        %3155 = vmatprep.subr.bf16.mxu0 %v2840
        %3156 = vmatpush1.bf16.msra.mxu0 %v2839
        %3157 = vmatprep.subr.bf16.mxu0 %v2844
        %3158 = vmatpush1.bf16.msra.mxu0 %v2843
        %3159 = vmatprep.subr.bf16.mxu0 %v2848
        %3160 = vmatpush1.bf16.msra.mxu0 %v2847
        %3161 = vmatprep.subr.bf16.mxu0 %v2852
        %3162 = vmatpush1.bf16.msra.mxu0 %v2851
        %3163 = vmatprep.subr.bf16.mxu0 %v2856
        %3164 = vmatpush1.bf16.msra.mxu0 %v2855
        %3165 = vmatprep.subr.bf16.mxu0 %v2860
        %3166 = vmatpush1.bf16.msra.mxu0 %v2859
        %3167 = vmatprep.mubr.bf16.mxu0 %v2282
        %3168 = vmatmul.mubr.bf16.gmra.mrb[0].mxu0 %v2281
        %v3169 = vpop.f32.mrb[0].mxu0
        %v3170 = vadd.f32 0.0, %v3169
        %v3171 = vpop.f32.mrb[0].mxu0
        %v3172 = vadd.f32 0.0, %v3171
        %v3173 = vpop.f32.mrb[0].mxu0
        %v3174 = vpop.f32.mrb[0].mxu0
        %3175 = vdwg.mxu0
        %3176 = vmatprep.subr.bf16.mxu0 %v2864
        %3177 = vmatpush1.bf16.msra.mxu0 %v2863
        %3178 = vmatprep.subr.bf16.mxu0 %v2868
        %3179 = vmatpush1.bf16.msra.mxu0 %v2867
        %3180 = vmatprep.subr.bf16.mxu0 %v2872
        %3181 = vmatpush1.bf16.msra.mxu0 %v2871
        %3182 = vmatprep.subr.bf16.mxu0 %v2876
        %3183 = vmatpush1.bf16.msra.mxu0 %v2875
        %3184 = vmatprep.subr.bf16.mxu0 %v2880
        %3185 = vmatpush1.bf16.msra.mxu0 %v2879
        %3186 = vmatprep.subr.bf16.mxu0 %v2884
        %3187 = vmatpush1.bf16.msra.mxu0 %v2883
        %3188 = vmatprep.subr.bf16.mxu0 %v2888
        %3189 = vmatpush1.bf16.msra.mxu0 %v2887
        %3190 = vmatprep.subr.bf16.mxu0 %v2892
        %3191 = vmatpush1.bf16.msra.mxu0 %v2891
        %3192 = vmatprep.subr.bf16.mxu0 %v2896
        %3193 = vmatpush1.bf16.msra.mxu0 %v2895
        %3194 = vmatprep.subr.bf16.mxu0 %v2900
        %3195 = vmatpush1.bf16.msra.mxu0 %v2899
        %3196 = vmatprep.subr.bf16.mxu0 %v2904
        %3197 = vmatpush1.bf16.msra.mxu0 %v2903
        %3198 = vmatprep.subr.bf16.mxu0 %v2908
        %3199 = vmatpush1.bf16.msra.mxu0 %v2907
        %3200 = vmatprep.subr.bf16.mxu0 %v2912
        %3201 = vmatpush1.bf16.msra.mxu0 %v2911
        %3202 = vmatprep.subr.bf16.mxu0 %v2916
        %3203 = vmatpush1.bf16.msra.mxu0 %v2915
        %3204 = vmatprep.subr.bf16.mxu0 %v2920
        %3205 = vmatpush1.bf16.msra.mxu0 %v2919
        %3206 = vmatprep.subr.bf16.mxu0 %v2924
        %3207 = vmatpush1.bf16.msra.mxu0 %v2923
        %3208 = vmatprep.mubr.bf16.mxu0 %v2284
        %3209 = vmatmul.mubr.bf16.gmra.mrb[0].mxu0 %v2283
        %v3210 = vpop.f32.mrb[0].mxu0
        %v3211 = vadd.f32 %v3170, %v3210
        %v3212 = vpop.f32.mrb[0].mxu0
        %v3213 = vadd.f32 %v3172, %v3212
        %v3214 = vpop.f32.mrb[0].mxu0
        %v3215 = vpop.f32.mrb[0].mxu0
        %3216 = vdwg.mxu0
        %v3217 = vld [vmem:[%s4] ss:$2 sm:$0xf]
        %v3219 = vlaneseq
        %v3220 = vshrl.u32 %v3219, 7
        %v3221 = vsub.s32 0, %v3220
        %v3222 = vrot.slane %v3217, %v3221
        %v3223 = vlaneseq
        %v3224 = vshrl.u32 %v3223, 7
        %v3225 = vsub.s32 1, %v3224
        %v3226 = vrot.slane %v3217, %v3225
        %v3227 = vlaneseq
        %v3228 = vshrl.u32 %v3227, 7
        %v3229 = vsub.s32 2, %v3228
        %v3230 = vrot.slane %v3217, %v3229
        %v3231 = vlaneseq
        %v3232 = vshrl.u32 %v3231, 7
        %v3233 = vsub.s32 3, %v3232
        %v3234 = vrot.slane %v3217, %v3233
        %v3239 = vmul.f32 %v3129, %v3222
        %v3240 = vmul.f32 %v3131, %v3226
        %v3241 = vmul.f32 %v3211, %v3230
        %v3242 = vmul.f32 %v3213, %v3234
        %s3243 = scalar_lea.vmem %s4, 1
        %v3244 = vld [vmem:[%s3243] ss:$2 sm:$0xf]
        %v3246 = vlaneseq
        %v3247 = vshrl.u32 %v3246, 7
        %v3248 = vsub.s32 0, %v3247
        %v3249 = vrot.slane %v3244, %v3248
        %v3250 = vlaneseq
        %v3251 = vshrl.u32 %v3250, 7
        %v3252 = vsub.s32 1, %v3251
        %v3253 = vrot.slane %v3244, %v3252
        %v3254 = vlaneseq
        %v3255 = vshrl.u32 %v3254, 7
        %v3256 = vsub.s32 2, %v3255
        %v3257 = vrot.slane %v3244, %v3256
        %v3258 = vlaneseq
        %v3259 = vshrl.u32 %v3258, 7
        %v3260 = vsub.s32 3, %v3259
        %v3261 = vrot.slane %v3244, %v3260
        %v3266 = vadd.f32 %v3239, %v3249
        %v3267 = vadd.f32 %v3240, %v3253
        %v3268 = vadd.f32 %v3241, %v3257
        %v3269 = vadd.f32 %v3242, %v3261
        %3270 = vst [vmem:[%s284] sm:$0xff] %v3266
        %3271 = vst [vmem:[%s284 + $0x8] sm:$0xff] %v3267
        %3272 = vst [vmem:[%s284 + $0x10] sm:$0xff] %v3268
        %3273 = vst [vmem:[%s284 + $0x18] sm:$0xff] %v3269
        %s3274 = sand.u32 %s142, 1
        %s3275 = scalar_lea.sflag [#allocation4], %s3274
        %s3276 = sand.u32 %s142, 1
        %s3277 = smul.addr %s3276, 32
        %s3278 = scalar_lea.vmem [#allocation10], %s3277
        // Predicated region
        $region57: #{tpu_custom_call.1} parent=39 // pred_check
          %p3279 = pneg %p152
        $region58: #{tpu_custom_call.1} parent=39 // pred_check_branch
          %3281 = sbr.rel (%p3279) target = $region60
        $region59: #{tpu_custom_call.1} parent=39 // pred_region
          %s3283 = ssub.s32 512, 512
          %3284 = vsyncadd %s3275, %s3283
          %s3285 = smul.addr %s24, 4
          %s3286 = smul.addr %s3285, 128
          %s3287 = scalar_lea.hbm %s5, %s3286
          %s3289 = sshll.u32 %s3278, 4
          %s3290 = int_to_ptr.vmem [resolvable:$true] %s3289
          %3292 = dma.vmem_to_hbm [thread:$0]  %s3290, 512, %s3287, %s3275
        $region60: #{tpu_custom_call.1} parent=39 // pred_fallthru
          _
      $region40: #{tpu_custom_call.1} parent=5 // pred_fallthru
        _
      %p3293 = scmp.le.s32.totalorder 2, %s19
      // Predicated region
      $region61: #{tpu_custom_call.1} parent=5 // pred_check
        %p3294 = pneg %p3293
      $region62: #{tpu_custom_call.1} parent=5 // pred_check_branch
        %3296 = sbr.rel (%p3294) target = $region64
      $region63: #{tpu_custom_call.1} parent=5 // pred_region
        %s3297 = ssub.s32 %s19, 2
        // Predicated region
        $region65: #{tpu_custom_call.1} parent=63 // pred_check
          %p3298 = pneg %p158
        $region66: #{tpu_custom_call.1} parent=63 // pred_check_branch
          %3300 = sbr.rel (%p3298) target = $region68
        $region67: #{tpu_custom_call.1} parent=63 // pred_region
          %s3301 = sand.u32 %s143, 1
          %s3302 = scalar_lea.sflag [#allocation4], %s3301
          %s3303 = sand.u32 %s143, 1
          %s3304 = smul.addr %s3303, 32
          %s3305 = scalar_lea.vmem [#allocation10], %s3304
          %3306 = dma.done %s3302, 512
        $region68: #{tpu_custom_call.1} parent=63 // pred_fallthru
          _
      $region64: #{tpu_custom_call.1} parent=5 // pred_fallthru
        _
    $region6: #{tpu_custom_call.1} parent=1 // loop_footer
      %s23 = sadd.s32 1, %s19
    $region7: #{tpu_custom_call.1} parent=1 // loop_footer_branch
      %18 = sbr.rel target = $region3
    $region8: #{tpu_custom_call.1} parent=1 // loop_exit
      _
    %3307 = vsyncpa [#allocation3], 1
    %s3308 = scalar_lea.sflag [#allocation3], 1
    %3309 = vsyncpa %s3308, 1
    %3310 = vsyncpa [#allocation6], 1
    %3311 = vsyncpa [#allocation9], 1
    %3312 = vsyncpa [#allocation4], 1
    %s3313 = scalar_lea.sflag [#allocation4], 1
    %3314 = vsyncpa %s3313, 1

</llo_original>
